<compile_context>
chip_gen: v6e
topology: v6e:2x2x1
jax: 0.10.0
libtpu: 0.0.40
codegen_flags: <defaults>
</compile_context>

<pallas_src>
import jax
import jax.numpy as jnp
from jax.experimental import pallas as pl
from jax.experimental.pallas import tpu as pltpu

H1 = 1024
H2 = 512
BN_EPS = 1e-5
NEG_SLOPE = 0.2

MAX_GROUP_ROWS = 2048            # rows per branch per grid step (feedback: 1024-2048)
VMEM_BUDGET = 20 * 1024 * 1024   # double-buffered activation+output working-set cap


def _project_kernel(xs_ref, was_ref, bas_ref, wbs_ref, bbs_ref,
                    xt_ref, wat_ref, bat_ref, wbt_ref, bbt_ref,
                    os_ref, ot_ref, oc_ref):
    """One task-group tile: both branches, fused-linear -> LeakyReLU(0.2) -> linear."""
    k, n, _ = xs_ref.shape

    def branch(x_ref, wa_ref, ba_ref, wb_ref, bb_ref):
        x = x_ref[...].reshape(k * n, x_ref.shape[-1])          # bf16 activations
        h = jnp.dot(x, wa_ref[...], preferred_element_type=jnp.float32) + ba_ref[...]
        h = jnp.where(h >= 0, h, NEG_SLOPE * h)                 # LeakyReLU(0.2), f32 VPU
        h = jnp.dot(h.astype(jnp.bfloat16), wb_ref[...],
                    preferred_element_type=jnp.float32) + bb_ref[...]
        return h.reshape(k, n, H2).astype(os_ref.dtype)         # bf16 out

    s = branch(xs_ref, was_ref, bas_ref, wbs_ref, bbs_ref)
    t = branch(xt_ref, wat_ref, bat_ref, wbt_ref, bbt_ref)
    os_ref[...] = s
    ot_ref[...] = t
    # combine layout == torch.cat([src_3d, tar_3d], axis=1): (task, branch, data, 512)
    oc_ref[:, 0, :, :] = s
    oc_ref[:, 1, :, :] = t


def _fold_branch(params):
    """Fuse Linear1@Linear2 and fold both eval-mode BatchNorms into the weights."""
    w1, b1, w2, b2, s1, t1, w3, b3, s2, t2 = params
    w12 = w1 @ w2                      # (F, 512)
    b12 = b1 @ w2 + b2                 # (1, 512)
    wa = w12 * s1                      # BN1 folded into the fused linear
    ba = b12 * s1 + t1
    wb = w3 * s2                       # BN2 folded into Linear3
    bb = b3 * s2 + t2
    f_in = wa.shape[0]
    f_pad = ((f_in + 127) // 128) * 128
    wa = jnp.pad(wa, ((0, f_pad - f_in), (0, 0)))   # zero rows pair with zero-padded x cols
    return wa.astype(jnp.bfloat16), ba, wb.astype(jnp.bfloat16), bb, f_pad


def _tasks_per_tile(num_task, num_data, f_pad_s, f_pad_t):
    """Largest task-group size within the row cap and the double-buffered VMEM budget."""
    # bf16 bytes per task, double-buffered: x_src + x_tar + o_src + o_tar + o_comb(=2x)
    bytes_per_task = 2 * num_data * 2 * (f_pad_s + f_pad_t + 4 * H2)
    k_budget = max(1, VMEM_BUDGET // bytes_per_task)
    k_rows = max(1, MAX_GROUP_ROWS // num_data)
    # TODO(synk): tile inside num_data when a single task exceeds the row/VMEM budget.
    return int(max(1, min(num_task, k_budget, k_rows)))


@jax.jit
def project_network_forward(src_feat, tar_feat, src_params, tar_params):
    """Mirrors ProjectNetwork.forward (eval mode)."""
    num_task, num_data, src_fea = src_feat.shape
    tar_fea = tar_feat.shape[2]

    # --- wrapper-side algebra: fused + folded weights, bf16
    wa_s, ba_s, wb_s, bb_s, f_pad_s = _fold_branch(src_params)
    wa_t, ba_t, wb_t, bb_t, f_pad_t = _fold_branch(tar_params)

    # pad each branch to its own lane-aligned width; bf16 cast fused into the same pass
    xs = jnp.pad(src_feat, ((0, 0), (0, 0), (0, f_pad_s - src_fea))).astype(jnp.bfloat16)
    xt = jnp.pad(tar_feat, ((0, 0), (0, 0), (0, f_pad_t - tar_fea))).astype(jnp.bfloat16)

    k = _tasks_per_tile(num_task, num_data, f_pad_s, f_pad_t)
    grid = (pl.cdiv(num_task, k),)      # partial last task-group is fine (writes dropped)

    o_src, o_tar, o_comb = pl.pallas_call(
        _project_kernel,
        out_shape=(
            jax.ShapeDtypeStruct((num_task, num_data, H2), jnp.bfloat16),
            jax.ShapeDtypeStruct((num_task, num_data, H2), jnp.bfloat16),
            jax.ShapeDtypeStruct((num_task, 2, num_data, H2), jnp.bfloat16),
        ),
        grid_spec=pltpu.PrefetchScalarGridSpec(
            num_scalar_prefetch=0,
            grid=grid,
            in_specs=[
                # src branch: activations tile + resident weights/biases
                pl.BlockSpec((k, num_data, f_pad_s), lambda i: (i, 0, 0)),
                pl.BlockSpec((f_pad_s, H2), lambda i: (0, 0)),
                pl.BlockSpec((1, H2), lambda i: (0, 0)),
                pl.BlockSpec((H2, H2), lambda i: (0, 0)),
                pl.BlockSpec((1, H2), lambda i: (0, 0)),
                # tar branch
                pl.BlockSpec((k, num_data, f_pad_t), lambda i: (i, 0, 0)),
                pl.BlockSpec((f_pad_t, H2), lambda i: (0, 0)),
                pl.BlockSpec((1, H2), lambda i: (0, 0)),
                pl.BlockSpec((H2, H2), lambda i: (0, 0)),
                pl.BlockSpec((1, H2), lambda i: (0, 0)),
            ],
            out_specs=(
                pl.BlockSpec((k, num_data, H2), lambda i: (i, 0, 0)),
                pl.BlockSpec((k, num_data, H2), lambda i: (i, 0, 0)),
                pl.BlockSpec((k, 2, num_data, H2), lambda i: (i, 0, 0, 0)),
            ),
        ),
        compiler_params=pltpu.CompilerParams(
            dimension_semantics=("parallel",),
            vmem_limit_bytes=32 * 1024 * 1024),
    )(xs, wa_s, ba_s, wb_s, bb_s, xt, wa_t, ba_t, wb_t, bb_t)

    # all three results are contiguous reshapes of kernel outputs — no extra copies
    src_feat_1 = o_src.reshape(num_task * num_data, H2)
    tar_feat_1 = o_tar.reshape(num_task * num_data, H2)
    combine_fea = o_comb.reshape(num_task * num_data * 2, H2)
    return src_feat_1, tar_feat_1, combine_fea


# ---------------------------------------------------------------------------
# synthetic params + plain-JAX reference (eval-mode PyTorch semantics)
# ---------------------------------------------------------------------------
def init_branch(key, in_features):
    """Deterministic synthetic params for one nn.Sequential branch."""
    ks = jax.random.split(key, 10)

    def lin(kw, kb, fi, fo):
        bound = 1.0 / float(fi) ** 0.5
        w = jax.random.uniform(kw, (fi, fo), jnp.float32, -bound, bound)
        b = jax.random.uniform(kb, (1, fo), jnp.float32, -bound, bound)
        return w, b

    w1, b1 = lin(ks[0], ks[1], in_features, H1)
    w2, b2 = lin(ks[2], ks[3], H1, H2)
    w3, b3 = lin(ks[4], ks[5], H2, H2)

    def bn(kg, kb):
        gamma = 1.0 + 0.1 * jax.random.normal(kg, (1, H2), jnp.float32)
        beta = 0.1 * jax.random.normal(kb, (1, H2), jnp.float32)
        running_mean = jnp.zeros((1, H2), jnp.float32)
        running_var = jnp.ones((1, H2), jnp.float32)
        scale = gamma * jax.lax.rsqrt(running_var + BN_EPS)
        shift = beta - running_mean * scale
        return scale, shift

    s1, t1 = bn(ks[6], ks[7])
    s2, t2 = bn(ks[8], ks[9])
    return (w1, b1, w2, b2, s1, t1, w3, b3, s2, t2)


def _reference_branch(x, params):
    w1, b1, w2, b2, s1, t1, w3, b3, s2, t2 = params
    h = x @ w1 + b1
    h = h @ w2 + b2
    h = h * s1 + t1
    h = jnp.where(h >= 0, h, NEG_SLOPE * h)
    h = h @ w3 + b3
    return h * s2 + t2


if __name__ == "__main__":
    num_task, num_data = 2, 16
    src_fea, tar_fea = 32, 48

    key = jax.random.PRNGKey(0)
    k_src, k_tar, k_ps, k_pt = jax.random.split(key, 4)
    src = jax.random.normal(k_src, (num_task, num_data, src_fea), jnp.float32)
    tar = jax.random.normal(k_tar, (num_task, num_data, tar_fea), jnp.float32)
    src_params = init_branch(k_ps, src_fea)
    tar_params = init_branch(k_pt, tar_fea)

    src_out, tar_out, combine = project_network_forward(
        src, tar, src_params, tar_params)
    jax.block_until_ready((src_out, tar_out, combine))

    # correctness check against a plain-JAX f32 reference (bf16 weights/outputs -> looser tol)
    ref_src = _reference_branch(src.reshape(-1, src_fea), src_params)
    ref_tar = _reference_branch(tar.reshape(-1, tar_fea), tar_params)
    ref_comb = jnp.concatenate(
        [ref_src.reshape(num_task, num_data, H2),
         ref_tar.reshape(num_task, num_data, H2)], axis=1
    ).reshape(num_task * num_data * 2, H2)

    assert src_out.shape == (num_task * num_data, H2)
    assert tar_out.shape == (num_task * num_data, H2)
    assert combine.shape == (num_task * num_data * 2, H2)
    tol = dict(atol=5e-2, rtol=5e-2)
    assert jnp.allclose(src_out.astype(jnp.float32), ref_src, **tol)
    assert jnp.allclose(tar_out.astype(jnp.float32), ref_tar, **tol)
    assert jnp.allclose(combine.astype(jnp.float32), ref_comb, **tol)

    print("KERNEL_OK")
</pallas_src>

<mosaic_0001>
module attributes {stable_mosaic.version = 11 : i64} {
  func.func @_project_kernel(%arg0: i32, %arg1: memref<2x16x128xbf16, #tpu.memory_space<vmem>>, %arg2: memref<128x512xbf16, #tpu.memory_space<vmem>>, %arg3: memref<1x512xf32, #tpu.memory_space<vmem>>, %arg4: memref<512x512xbf16, #tpu.memory_space<vmem>>, %arg5: memref<1x512xf32, #tpu.memory_space<vmem>>, %arg6: memref<2x16x128xbf16, #tpu.memory_space<vmem>>, %arg7: memref<128x512xbf16, #tpu.memory_space<vmem>>, %arg8: memref<1x512xf32, #tpu.memory_space<vmem>>, %arg9: memref<512x512xbf16, #tpu.memory_space<vmem>>, %arg10: memref<1x512xf32, #tpu.memory_space<vmem>>, %arg11: memref<2x16x512xbf16, #tpu.memory_space<vmem>>, %arg12: memref<2x16x512xbf16, #tpu.memory_space<vmem>>, %arg13: memref<2x2x16x512xbf16, #tpu.memory_space<vmem>>) attributes {dimension_semantics = [#tpu.dimension_semantics<parallel>], iteration_bounds = array<i64: 1>, scalar_prefetch = 0 : i64, scratch_operands = 0 : i64, tpu.core_type = #tpu.core_type<tc>, window_params = [{transform_indices = @transform_0, window_bounds = array<i64: 2, 16, 128>}, {pipeline_mode = #tpu.pipeline_mode<synchronous>, transform_indices = @transform_1, window_bounds = array<i64: 128, 512>}, {pipeline_mode = #tpu.pipeline_mode<synchronous>, transform_indices = @transform_2, window_bounds = array<i64: 1, 512>}, {pipeline_mode = #tpu.pipeline_mode<synchronous>, transform_indices = @transform_3, window_bounds = array<i64: 512, 512>}, {pipeline_mode = #tpu.pipeline_mode<synchronous>, transform_indices = @transform_4, window_bounds = array<i64: 1, 512>}, {transform_indices = @transform_5, window_bounds = array<i64: 2, 16, 128>}, {pipeline_mode = #tpu.pipeline_mode<synchronous>, transform_indices = @transform_6, window_bounds = array<i64: 128, 512>}, {pipeline_mode = #tpu.pipeline_mode<synchronous>, transform_indices = @transform_7, window_bounds = array<i64: 1, 512>}, {pipeline_mode = #tpu.pipeline_mode<synchronous>, transform_indices = @transform_8, window_bounds = array<i64: 512, 512>}, {pipeline_mode = #tpu.pipeline_mode<synchronous>, transform_indices = @transform_9, window_bounds = array<i64: 1, 512>}, {transform_indices = @transform_10, window_bounds = array<i64: 2, 16, 512>}, {transform_indices = @transform_11, window_bounds = array<i64: 2, 16, 512>}, {transform_indices = @transform_12, window_bounds = array<i64: 2, 2, 16, 512>}]} {
    %c0 = arith.constant 0 : index
    %c0_0 = arith.constant 0 : index
    %c0_1 = arith.constant 0 : index
    %0 = vector.load %arg1[%c0, %c0_0, %c0_1] : memref<2x16x128xbf16, #tpu.memory_space<vmem>>, vector<2x16x128xbf16>
    %1 = vector.shape_cast %0 : vector<2x16x128xbf16> to vector<32x128xbf16>
    %c0_2 = arith.constant 0 : index
    %c0_3 = arith.constant 0 : index
    %2 = vector.load %arg2[%c0_2, %c0_3] : memref<128x512xbf16, #tpu.memory_space<vmem>>, vector<128x512xbf16>
    %cst = arith.constant dense<0.000000e+00> : vector<32x512xf32>
    %3 = tpu.matmul %1, %2, %cst {dimension_numbers = #tpu.dot_dimension_numbers<[1], [0], [0], [1], [0, 0, 1, 1], [], []>} : vector<32x128xbf16>, vector<128x512xbf16>, vector<32x512xf32> -> vector<32x512xf32>
    %c0_4 = arith.constant 0 : index
    %c0_5 = arith.constant 0 : index
    %4 = vector.load %arg3[%c0_4, %c0_5] : memref<1x512xf32, #tpu.memory_space<vmem>>, vector<1x512xf32>
    %5 = vector.broadcast %4 : vector<1x512xf32> to vector<32x512xf32>
    %6 = arith.addf %3, %5 : vector<32x512xf32>
    %cst_6 = arith.constant 0.000000e+00 : f32
    %7 = vector.broadcast %cst_6 : f32 to vector<32x512xf32>
    %8 = arith.cmpf oge, %6, %7 : vector<32x512xf32>
    %cst_7 = arith.constant 2.000000e-01 : f32
    %9 = vector.broadcast %cst_7 : f32 to vector<32x512xf32>
    %10 = arith.mulf %9, %6 : vector<32x512xf32>
    %11 = arith.select %8, %6, %10 : vector<32x512xi1>, vector<32x512xf32>
    %12 = arith.truncf %11 : vector<32x512xf32> to vector<32x512xbf16>
    %c0_8 = arith.constant 0 : index
    %c0_9 = arith.constant 0 : index
    %13 = vector.load %arg4[%c0_8, %c0_9] : memref<512x512xbf16, #tpu.memory_space<vmem>>, vector<512x512xbf16>
    %cst_10 = arith.constant dense<0.000000e+00> : vector<32x512xf32>
    %14 = tpu.matmul %12, %13, %cst_10 {dimension_numbers = #tpu.dot_dimension_numbers<[1], [0], [0], [1], [0, 0, 1, 1], [], []>} : vector<32x512xbf16>, vector<512x512xbf16>, vector<32x512xf32> -> vector<32x512xf32>
    %c0_11 = arith.constant 0 : index
    %c0_12 = arith.constant 0 : index
    %15 = vector.load %arg5[%c0_11, %c0_12] : memref<1x512xf32, #tpu.memory_space<vmem>>, vector<1x512xf32>
    %16 = vector.broadcast %15 : vector<1x512xf32> to vector<32x512xf32>
    %17 = arith.addf %14, %16 : vector<32x512xf32>
    %18 = vector.shape_cast %17 : vector<32x512xf32> to vector<2x16x512xf32>
    %19 = arith.truncf %18 : vector<2x16x512xf32> to vector<2x16x512xbf16>
    %c0_13 = arith.constant 0 : index
    %c0_14 = arith.constant 0 : index
    %c0_15 = arith.constant 0 : index
    %20 = vector.load %arg6[%c0_13, %c0_14, %c0_15] : memref<2x16x128xbf16, #tpu.memory_space<vmem>>, vector<2x16x128xbf16>
    %21 = vector.shape_cast %20 : vector<2x16x128xbf16> to vector<32x128xbf16>
    %c0_16 = arith.constant 0 : index
    %c0_17 = arith.constant 0 : index
    %22 = vector.load %arg7[%c0_16, %c0_17] : memref<128x512xbf16, #tpu.memory_space<vmem>>, vector<128x512xbf16>
    %cst_18 = arith.constant dense<0.000000e+00> : vector<32x512xf32>
    %23 = tpu.matmul %21, %22, %cst_18 {dimension_numbers = #tpu.dot_dimension_numbers<[1], [0], [0], [1], [0, 0, 1, 1], [], []>} : vector<32x128xbf16>, vector<128x512xbf16>, vector<32x512xf32> -> vector<32x512xf32>
    %c0_19 = arith.constant 0 : index
    %c0_20 = arith.constant 0 : index
    %24 = vector.load %arg8[%c0_19, %c0_20] : memref<1x512xf32, #tpu.memory_space<vmem>>, vector<1x512xf32>
    %25 = vector.broadcast %24 : vector<1x512xf32> to vector<32x512xf32>
    %26 = arith.addf %23, %25 : vector<32x512xf32>
    %cst_21 = arith.constant 0.000000e+00 : f32
    %27 = vector.broadcast %cst_21 : f32 to vector<32x512xf32>
    %28 = arith.cmpf oge, %26, %27 : vector<32x512xf32>
    %cst_22 = arith.constant 2.000000e-01 : f32
    %29 = vector.broadcast %cst_22 : f32 to vector<32x512xf32>
    %30 = arith.mulf %29, %26 : vector<32x512xf32>
    %31 = arith.select %28, %26, %30 : vector<32x512xi1>, vector<32x512xf32>
    %32 = arith.truncf %31 : vector<32x512xf32> to vector<32x512xbf16>
    %c0_23 = arith.constant 0 : index
    %c0_24 = arith.constant 0 : index
    %33 = vector.load %arg9[%c0_23, %c0_24] : memref<512x512xbf16, #tpu.memory_space<vmem>>, vector<512x512xbf16>
    %cst_25 = arith.constant dense<0.000000e+00> : vector<32x512xf32>
    %34 = tpu.matmul %32, %33, %cst_25 {dimension_numbers = #tpu.dot_dimension_numbers<[1], [0], [0], [1], [0, 0, 1, 1], [], []>} : vector<32x512xbf16>, vector<512x512xbf16>, vector<32x512xf32> -> vector<32x512xf32>
    %c0_26 = arith.constant 0 : index
    %c0_27 = arith.constant 0 : index
    %35 = vector.load %arg10[%c0_26, %c0_27] : memref<1x512xf32, #tpu.memory_space<vmem>>, vector<1x512xf32>
    %36 = vector.broadcast %35 : vector<1x512xf32> to vector<32x512xf32>
    %37 = arith.addf %34, %36 : vector<32x512xf32>
    %38 = vector.shape_cast %37 : vector<32x512xf32> to vector<2x16x512xf32>
    %39 = arith.truncf %38 : vector<2x16x512xf32> to vector<2x16x512xbf16>
    %c0_28 = arith.constant 0 : index
    %c0_29 = arith.constant 0 : index
    %c0_30 = arith.constant 0 : index
    %40 = vector.load %arg11[%c0_28, %c0_29, %c0_30] : memref<2x16x512xbf16, #tpu.memory_space<vmem>>, vector<2x16x512xbf16>
    tpu.vector_store %arg11[%c0_28, %c0_29, %c0_30], %19 {strides = array<i32>} : memref<2x16x512xbf16, #tpu.memory_space<vmem>>, vector<2x16x512xbf16>,
    %c0_31 = arith.constant 0 : index
    %c0_32 = arith.constant 0 : index
    %c0_33 = arith.constant 0 : index
    %41 = vector.load %arg12[%c0_31, %c0_32, %c0_33] : memref<2x16x512xbf16, #tpu.memory_space<vmem>>, vector<2x16x512xbf16>
    tpu.vector_store %arg12[%c0_31, %c0_32, %c0_33], %39 {strides = array<i32>} : memref<2x16x512xbf16, #tpu.memory_space<vmem>>, vector<2x16x512xbf16>,
    %c0_34 = arith.constant 0 : index
    %c0_35 = arith.constant 0 : index
    %c0_36 = arith.constant 0 : index
    %c0_37 = arith.constant 0 : index
    %42 = vector.load %arg13[%c0_34, %c0_35, %c0_36, %c0_37] : memref<2x2x16x512xbf16, #tpu.memory_space<vmem>>, vector<2x1x16x512xbf16>
    %43 = vector.shape_cast %42 : vector<2x1x16x512xbf16> to vector<2x16x512xbf16>
    %44 = vector.shape_cast %19 : vector<2x16x512xbf16> to vector<2x1x16x512xbf16>
    tpu.vector_store %arg13[%c0_34, %c0_35, %c0_36, %c0_37], %44 {strides = array<i32>} : memref<2x2x16x512xbf16, #tpu.memory_space<vmem>>, vector<2x1x16x512xbf16>,
    %c0_38 = arith.constant 0 : index
    %c1 = arith.constant 1 : index
    %c0_39 = arith.constant 0 : index
    %c0_40 = arith.constant 0 : index
    %45 = vector.load %arg13[%c0_38, %c1, %c0_39, %c0_40] : memref<2x2x16x512xbf16, #tpu.memory_space<vmem>>, vector<2x1x16x512xbf16>
    %46 = vector.shape_cast %45 : vector<2x1x16x512xbf16> to vector<2x16x512xbf16>
    %47 = vector.shape_cast %39 : vector<2x16x512xbf16> to vector<2x1x16x512xbf16>
    tpu.vector_store %arg13[%c0_38, %c1, %c0_39, %c0_40], %47 {strides = array<i32>} : memref<2x2x16x512xbf16, #tpu.memory_space<vmem>>, vector<2x1x16x512xbf16>,
    return
  }
  func.func @transform_0(%arg0: i32) -> (i32, i32, i32) {
    %c0_i32 = arith.constant 0 : i32
    %c0_i32_0 = arith.constant 0 : i32
    %c0_i32_1 = arith.constant 0 : i32
    return %arg0, %c0_i32, %c0_i32_0 : i32, i32, i32
  }
  func.func @transform_1(%arg0: i32) -> (i32, i32) {
    %c0_i32 = arith.constant 0 : i32
    %c0_i32_0 = arith.constant 0 : i32
    %c0_i32_1 = arith.constant 0 : i32
    return %c0_i32, %c0_i32_0 : i32, i32
  }
  func.func @transform_2(%arg0: i32) -> (i32, i32) {
    %c0_i32 = arith.constant 0 : i32
    %c0_i32_0 = arith.constant 0 : i32
    %c0_i32_1 = arith.constant 0 : i32
    return %c0_i32, %c0_i32_0 : i32, i32
  }
  func.func @transform_3(%arg0: i32) -> (i32, i32) {
    %c0_i32 = arith.constant 0 : i32
    %c0_i32_0 = arith.constant 0 : i32
    %c0_i32_1 = arith.constant 0 : i32
    return %c0_i32, %c0_i32_0 : i32, i32
  }
  func.func @transform_4(%arg0: i32) -> (i32, i32) {
    %c0_i32 = arith.constant 0 : i32
    %c0_i32_0 = arith.constant 0 : i32
    %c0_i32_1 = arith.constant 0 : i32
    return %c0_i32, %c0_i32_0 : i32, i32
  }
  func.func @transform_5(%arg0: i32) -> (i32, i32, i32) {
    %c0_i32 = arith.constant 0 : i32
    %c0_i32_0 = arith.constant 0 : i32
    %c0_i32_1 = arith.constant 0 : i32
    return %arg0, %c0_i32, %c0_i32_0 : i32, i32, i32
  }
  func.func @transform_6(%arg0: i32) -> (i32, i32) {
    %c0_i32 = arith.constant 0 : i32
    %c0_i32_0 = arith.constant 0 : i32
    %c0_i32_1 = arith.constant 0 : i32
    return %c0_i32, %c0_i32_0 : i32, i32
  }
  func.func @transform_7(%arg0: i32) -> (i32, i32) {
    %c0_i32 = arith.constant 0 : i32
    %c0_i32_0 = arith.constant 0 : i32
    %c0_i32_1 = arith.constant 0 : i32
    return %c0_i32, %c0_i32_0 : i32, i32
  }
  func.func @transform_8(%arg0: i32) -> (i32, i32) {
    %c0_i32 = arith.constant 0 : i32
    %c0_i32_0 = arith.constant 0 : i32
    %c0_i32_1 = arith.constant 0 : i32
    return %c0_i32, %c0_i32_0 : i32, i32
  }
  func.func @transform_9(%arg0: i32) -> (i32, i32) {
    %c0_i32 = arith.constant 0 : i32
    %c0_i32_0 = arith.constant 0 : i32
    %c0_i32_1 = arith.constant 0 : i32
    return %c0_i32, %c0_i32_0 : i32, i32
  }
  func.func @transform_10(%arg0: i32) -> (i32, i32, i32) {
    %c0_i32 = arith.constant 0 : i32
    %c0_i32_0 = arith.constant 0 : i32
    %c0_i32_1 = arith.constant 0 : i32
    return %arg0, %c0_i32, %c0_i32_0 : i32, i32, i32
  }
  func.func @transform_11(%arg0: i32) -> (i32, i32, i32) {
    %c0_i32 = arith.constant 0 : i32
    %c0_i32_0 = arith.constant 0 : i32
    %c0_i32_1 = arith.constant 0 : i32
    return %arg0, %c0_i32, %c0_i32_0 : i32, i32, i32
  }
  func.func @transform_12(%arg0: i32) -> (i32, i32, i32, i32) {
    %c0_i32 = arith.constant 0 : i32
    %c0_i32_0 = arith.constant 0 : i32
    %c0_i32_1 = arith.constant 0 : i32
    %c0_i32_2 = arith.constant 0 : i32
    return %arg0, %c0_i32, %c0_i32_0, %c0_i32_1 : i32, i32, i32, i32
  }
}

</mosaic_0001>

<llo_original>
// kernel: project_network_forward.1
$region0: #{project_network_forward.1}
  #allocation0 [shape = 'u32[]', space=smem, size = 0x4, offset = 0x4, fixed_abs, tag = 'smem constant byte address 0x4 - core index']
  #allocation1 [shape = 'u32[144,128]{1,0:T(1,128)}', space=vmem, size = 0x12000, scoped, tag = 'internal scratch']
  %s0 = inlined_call_operand.vmem [shape: bf16[2,16,128], index: 0, kind: input, shape index: {}]
  %s1 = inlined_call_operand.vmem [shape: bf16[128,512], index: 1, kind: input, shape index: {}]
  %s2 = inlined_call_operand.vmem [shape: f32[1,512], index: 2, kind: input, shape index: {}]
  %s3 = inlined_call_operand.vmem [shape: bf16[512,512], index: 3, kind: input, shape index: {}]
  %s4 = inlined_call_operand.vmem [shape: f32[1,512], index: 4, kind: input, shape index: {}]
  %s5 = inlined_call_operand.vmem [shape: bf16[2,16,128], index: 5, kind: input, shape index: {}]
  %s6 = inlined_call_operand.vmem [shape: bf16[128,512], index: 6, kind: input, shape index: {}]
  %s7 = inlined_call_operand.vmem [shape: f32[1,512], index: 7, kind: input, shape index: {}]
  %s8 = inlined_call_operand.vmem [shape: bf16[512,512], index: 8, kind: input, shape index: {}]
  %s9 = inlined_call_operand.vmem [shape: f32[1,512], index: 9, kind: input, shape index: {}]
  %s10 = inlined_call_operand.hbm [shape: bf16[2,16,512], index: 10, kind: output, shape index: {0}]
  %s11 = inlined_call_operand.hbm [shape: bf16[2,16,512], index: 11, kind: output, shape index: {1}]
  %s12 = inlined_call_operand.hbm [shape: bf16[2,2,16,512], index: 12, kind: output, shape index: {2}]
  %13 = xla_tuple %s10, %s11, %s12
  %s14 = sld [smem:[#allocation0]]
  $region66: #{project_network_forward.1} parent=0
    _
  %s16 = ssub.s32 1, %s14
  %s17 = scalar_select 0, %s16, %s14
  $region1: #{project_network_forward.1} parent=0
    #allocation2 [shape = 'u8[32768]{0}', space=vmem, size = 0x8000, scoped, tag = 'output window, operand 0, single buffered']
    #allocation3 [shape = 's32[1]{0}', space=sflag, size = 0x4, scoped, tag = 'scoped memory for project_network_forward.1']
    #allocation4 [shape = 'u8[32768]{0}', space=vmem, size = 0x8000, scoped, tag = 'output window, operand 1, single buffered']
    #allocation5 [shape = 's32[1]{0}', space=sflag, size = 0x4, scoped, tag = 'scoped memory for project_network_forward.1']
    #allocation6 [shape = 'u8[65536]{0}', space=vmem, size = 0x10000, scoped, tag = 'output window, operand 2, single buffered']
    %18 = vsyncpa [#allocation3], 0
    %19 = vsyncpa [#allocation5], 0
    // Predicated region
    $region2: #{project_network_forward.1} parent=1 // pred_check
      _
    $region3: #{project_network_forward.1} parent=1 // pred_check_branch
      %21 = sbr.rel (0) target = $region5
    $region4: #{project_network_forward.1} parent=1 // pred_region
      _
    $region5: #{project_network_forward.1} parent=1 // pred_fallthru
      _
    // Predicated region
    $region6: #{project_network_forward.1} parent=1 // pred_check
      _
    $region7: #{project_network_forward.1} parent=1 // pred_check_branch
      %23 = sbr.rel (0) target = $region9
    $region8: #{project_network_forward.1} parent=1 // pred_region
      _
    $region9: #{project_network_forward.1} parent=1 // pred_fallthru
      _
    // Predicated region
    $region10: #{project_network_forward.1} parent=1 // pred_check
      _
    $region11: #{project_network_forward.1} parent=1 // pred_check_branch
      %25 = sbr.rel (0) target = $region13
    $region12: #{project_network_forward.1} parent=1 // pred_region
      _
    $region13: #{project_network_forward.1} parent=1 // pred_fallthru
      _
    // Predicated region
    $region14: #{project_network_forward.1} parent=1 // pred_check
      _
    $region15: #{project_network_forward.1} parent=1 // pred_check_branch
      %27 = sbr.rel (0) target = $region17
    $region16: #{project_network_forward.1} parent=1 // pred_region
      _
    $region17: #{project_network_forward.1} parent=1 // pred_fallthru
      _
    // Predicated region
    $region18: #{project_network_forward.1} parent=1 // pred_check
      _
    $region19: #{project_network_forward.1} parent=1 // pred_check_branch
      %29 = sbr.rel (0) target = $region21
    $region20: #{project_network_forward.1} parent=1 // pred_region
      _
    $region21: #{project_network_forward.1} parent=1 // pred_fallthru
      _
    // Predicated region
    $region22: #{project_network_forward.1} parent=1 // pred_check
      _
    $region23: #{project_network_forward.1} parent=1 // pred_check_branch
      %31 = sbr.rel (0) target = $region25
    $region24: #{project_network_forward.1} parent=1 // pred_region
      _
    $region25: #{project_network_forward.1} parent=1 // pred_fallthru
      _
    // Predicated region
    $region26: #{project_network_forward.1} parent=1 // pred_check
      _
    $region27: #{project_network_forward.1} parent=1 // pred_check_branch
      %33 = sbr.rel (0) target = $region29
    $region28: #{project_network_forward.1} parent=1 // pred_region
      _
    $region29: #{project_network_forward.1} parent=1 // pred_fallthru
      _
    // Predicated region
    $region30: #{project_network_forward.1} parent=1 // pred_check
      _
    $region31: #{project_network_forward.1} parent=1 // pred_check_branch
      %35 = sbr.rel (0) target = $region33
    $region32: #{project_network_forward.1} parent=1 // pred_region
      _
    $region33: #{project_network_forward.1} parent=1 // pred_fallthru
      _
    // Predicated region
    $region34: #{project_network_forward.1} parent=1 // pred_check
      _
    $region35: #{project_network_forward.1} parent=1 // pred_check_branch
      %37 = sbr.rel (0) target = $region37
    $region36: #{project_network_forward.1} parent=1 // pred_region
      _
    $region37: #{project_network_forward.1} parent=1 // pred_fallthru
      _
    // Predicated region
    $region38: #{project_network_forward.1} parent=1 // pred_check
      _
    $region39: #{project_network_forward.1} parent=1 // pred_check_branch
      %39 = sbr.rel (0) target = $region41
    $region40: #{project_network_forward.1} parent=1 // pred_region
      _
    $region41: #{project_network_forward.1} parent=1 // pred_fallthru
      _
    %v41 = vld [vmem:[%s0] sm:$0xf]
    %v42 = vld [vmem:[%s0 + $0x4] sm:$0xf]
    %v43 = vld [vmem:[%s0 + $0x8] sm:$0xf]
    %v44 = vld [vmem:[%s0 + $0xc] sm:$0xf]
    %v45 = vld [vmem:[%s1] sm:$0xff]
    %v46 = vld [vmem:[%s1 + $0x8] sm:$0xff]
    %v47 = vld [vmem:[%s1 + $0x10] sm:$0xff]
    %v48 = vld [vmem:[%s1 + $0x18] sm:$0xff]
    %v49 = vld [vmem:[%s1 + $0x20] sm:$0xff]
    %v50 = vld [vmem:[%s1 + $0x28] sm:$0xff]
    %v51 = vld [vmem:[%s1 + $0x30] sm:$0xff]
    %v52 = vld [vmem:[%s1 + $0x38] sm:$0xff]
    %v53 = vld [vmem:[%s1 + $0x40] sm:$0xff]
    %v54 = vld [vmem:[%s1 + $0x48] sm:$0xff]
    %v55 = vld [vmem:[%s1 + $0x50] sm:$0xff]
    %v56 = vld [vmem:[%s1 + $0x58] sm:$0xff]
    %v57 = vld [vmem:[%s1 + $0x60] sm:$0xff]
    %v58 = vld [vmem:[%s1 + $0x68] sm:$0xff]
    %v59 = vld [vmem:[%s1 + $0x70] sm:$0xff]
    %v60 = vld [vmem:[%s1 + $0x78] sm:$0xff]
    %v61 = vld [vmem:[%s1 + $0x80] sm:$0xff]
    %v62 = vld [vmem:[%s1 + $0x88] sm:$0xff]
    %v63 = vld [vmem:[%s1 + $0x90] sm:$0xff]
    %v64 = vld [vmem:[%s1 + $0x98] sm:$0xff]
    %v65 = vld [vmem:[%s1 + $0xa0] sm:$0xff]
    %v66 = vld [vmem:[%s1 + $0xa8] sm:$0xff]
    %v67 = vld [vmem:[%s1 + $0xb0] sm:$0xff]
    %v68 = vld [vmem:[%s1 + $0xb8] sm:$0xff]
    %v69 = vld [vmem:[%s1 + $0xc0] sm:$0xff]
    %v70 = vld [vmem:[%s1 + $0xc8] sm:$0xff]
    %v71 = vld [vmem:[%s1 + $0xd0] sm:$0xff]
    %v72 = vld [vmem:[%s1 + $0xd8] sm:$0xff]
    %v73 = vld [vmem:[%s1 + $0xe0] sm:$0xff]
    %v74 = vld [vmem:[%s1 + $0xe8] sm:$0xff]
    %v75 = vld [vmem:[%s1 + $0xf0] sm:$0xff]
    %v76 = vld [vmem:[%s1 + $0xf8] sm:$0xff]
    %v77 = vld [vmem:[%s2] sm:$0xf]
    %v79 = vlaneseq
    %v80 = vshrl.u32 %v79, 7
    %v81 = vsub.s32 0, %v80
    %v82 = vrot.slane %v77, %v81
    %v83 = vlaneseq
    %v84 = vshrl.u32 %v83, 7
    %v85 = vsub.s32 1, %v84
    %v86 = vrot.slane %v77, %v85
    %v87 = vlaneseq
    %v88 = vshrl.u32 %v87, 7
    %v89 = vsub.s32 2, %v88
    %v90 = vrot.slane %v77, %v89
    %v91 = vlaneseq
    %v92 = vshrl.u32 %v91, 7
    %v93 = vsub.s32 3, %v92
    %v94 = vrot.slane %v77, %v93
    %v103 = vunpack.c.l.b16 %v41
    %v104 = vunpack.c.l.b16 %v42
    %v105 = vunpack.c.l.b16 %v43
    %v106 = vunpack.c.l.b16 %v44
    %v107 = vpack.c.b16 %v104, %v103
    %v108 = vpack.c.b16 %v106, %v105
    %v143 = vunpack.c.l.b16 %v45
    %v144 = vunpack.c.h.b16 %v45
    %v145 = vunpack.c.l.b16 %v46
    %v146 = vunpack.c.h.b16 %v46
    %v147 = vunpack.c.l.b16 %v47
    %v148 = vunpack.c.h.b16 %v47
    %v149 = vunpack.c.l.b16 %v48
    %v150 = vunpack.c.h.b16 %v48
    %v151 = vunpack.c.l.b16 %v49
    %v152 = vunpack.c.h.b16 %v49
    %v153 = vunpack.c.l.b16 %v50
    %v154 = vunpack.c.h.b16 %v50
    %v155 = vunpack.c.l.b16 %v51
    %v156 = vunpack.c.h.b16 %v51
    %v157 = vunpack.c.l.b16 %v52
    %v158 = vunpack.c.h.b16 %v52
    %v159 = vunpack.c.l.b16 %v53
    %v160 = vunpack.c.h.b16 %v53
    %v161 = vunpack.c.l.b16 %v54
    %v162 = vunpack.c.h.b16 %v54
    %v163 = vunpack.c.l.b16 %v55
    %v164 = vunpack.c.h.b16 %v55
    %v165 = vunpack.c.l.b16 %v56
    %v166 = vunpack.c.h.b16 %v56
    %v167 = vunpack.c.l.b16 %v57
    %v168 = vunpack.c.h.b16 %v57
    %v169 = vunpack.c.l.b16 %v58
    %v170 = vunpack.c.h.b16 %v58
    %v171 = vunpack.c.l.b16 %v59
    %v172 = vunpack.c.h.b16 %v59
    %v173 = vunpack.c.l.b16 %v60
    %v174 = vunpack.c.h.b16 %v60
    %v175 = vunpack.c.l.b16 %v61
    %v176 = vunpack.c.h.b16 %v61
    %v177 = vunpack.c.l.b16 %v62
    %v178 = vunpack.c.h.b16 %v62
    %v179 = vunpack.c.l.b16 %v63
    %v180 = vunpack.c.h.b16 %v63
    %v181 = vunpack.c.l.b16 %v64
    %v182 = vunpack.c.h.b16 %v64
    %v183 = vunpack.c.l.b16 %v65
    %v184 = vunpack.c.h.b16 %v65
    %v185 = vunpack.c.l.b16 %v66
    %v186 = vunpack.c.h.b16 %v66
    %v187 = vunpack.c.l.b16 %v67
    %v188 = vunpack.c.h.b16 %v67
    %v189 = vunpack.c.l.b16 %v68
    %v190 = vunpack.c.h.b16 %v68
    %v191 = vunpack.c.l.b16 %v69
    %v192 = vunpack.c.h.b16 %v69
    %v193 = vunpack.c.l.b16 %v70
    %v194 = vunpack.c.h.b16 %v70
    %v195 = vunpack.c.l.b16 %v71
    %v196 = vunpack.c.h.b16 %v71
    %v197 = vunpack.c.l.b16 %v72
    %v198 = vunpack.c.h.b16 %v72
    %v199 = vunpack.c.l.b16 %v73
    %v200 = vunpack.c.h.b16 %v73
    %v201 = vunpack.c.l.b16 %v74
    %v202 = vunpack.c.h.b16 %v74
    %v203 = vunpack.c.l.b16 %v75
    %v204 = vunpack.c.h.b16 %v75
    %v205 = vunpack.c.l.b16 %v76
    %v206 = vunpack.c.h.b16 %v76
    %v207 = vpack.c.b16 %v147, %v143
    %v208 = vpack.c.b16 %v148, %v144
    %v209 = vpack.c.b16 %v149, %v145
    %v210 = vpack.c.b16 %v150, %v146
    %v211 = vpack.c.b16 %v155, %v151
    %v212 = vpack.c.b16 %v156, %v152
    %v213 = vpack.c.b16 %v157, %v153
    %v214 = vpack.c.b16 %v158, %v154
    %v215 = vpack.c.b16 %v163, %v159
    %v216 = vpack.c.b16 %v164, %v160
    %v217 = vpack.c.b16 %v165, %v161
    %v218 = vpack.c.b16 %v166, %v162
    %v219 = vpack.c.b16 %v171, %v167
    %v220 = vpack.c.b16 %v172, %v168
    %v221 = vpack.c.b16 %v173, %v169
    %v222 = vpack.c.b16 %v174, %v170
    %v223 = vpack.c.b16 %v179, %v175
    %v224 = vpack.c.b16 %v180, %v176
    %v225 = vpack.c.b16 %v181, %v177
    %v226 = vpack.c.b16 %v182, %v178
    %v227 = vpack.c.b16 %v187, %v183
    %v228 = vpack.c.b16 %v188, %v184
    %v229 = vpack.c.b16 %v189, %v185
    %v230 = vpack.c.b16 %v190, %v186
    %v231 = vpack.c.b16 %v195, %v191
    %v232 = vpack.c.b16 %v196, %v192
    %v233 = vpack.c.b16 %v197, %v193
    %v234 = vpack.c.b16 %v198, %v194
    %v235 = vpack.c.b16 %v203, %v199
    %v236 = vpack.c.b16 %v204, %v200
    %v237 = vpack.c.b16 %v205, %v201
    %v238 = vpack.c.b16 %v206, %v202
    %271 = vmatprep.subr.bf16.mxu0 %v236
    %272 = vmatpush1.bf16.msra.mxu0 %v235
    %273 = vmatprep.subr.bf16.mxu0 %v232
    %274 = vmatpush1.bf16.msra.mxu0 %v231
    %275 = vmatprep.subr.bf16.mxu0 %v228
    %276 = vmatpush1.bf16.msra.mxu0 %v227
    %277 = vmatprep.subr.bf16.mxu0 %v224
    %278 = vmatpush1.bf16.msra.mxu0 %v223
    %279 = vmatprep.subr.bf16.mxu0 %v220
    %280 = vmatpush1.bf16.msra.mxu0 %v219
    %281 = vmatprep.subr.bf16.mxu0 %v216
    %282 = vmatpush1.bf16.msra.mxu0 %v215
    %283 = vmatprep.subr.bf16.mxu0 %v212
    %284 = vmatpush1.bf16.msra.mxu0 %v211
    %285 = vmatprep.subr.bf16.mxu0 %v208
    %286 = vmatpush1.bf16.msra.mxu0 %v207
    %287 = vmatprep.subr.bf16.mxu0 0
    %288 = vmatpush2.bf16.msra.mxu0 0
    %289 = vmatprep.subr.bf16.mxu0 0
    %290 = vmatpush2.bf16.msra.mxu0 0
    %291 = vmatprep.subr.bf16.mxu0 0
    %292 = vmatpush2.bf16.msra.mxu0 0
    %293 = vmatprep.subr.bf16.mxu0 0
    %294 = vmatpush2.bf16.msra.mxu0 0
    %295 = vmatprep.subr.bf16.mxu0 0
    %296 = vmatpush2.bf16.msra.mxu0 0
    %297 = vmatprep.subr.bf16.mxu0 0
    %298 = vmatpush2.bf16.msra.mxu0 0
    %299 = vmatprep.subr.bf16.mxu0 0
    %300 = vmatpush2.bf16.msra.mxu0 0
    %301 = vmatprep.subr.bf16.mxu0 0
    %302 = vmatpush2.bf16.msra.mxu0 0
    %303 = vmatprep.mubr.bf16.mxu0 0
    %304 = vmatmul.mubr.bf16.gmra.mxu0 %v107
    %v305 = vpop.f32.mrf.mxu0
    %v306 = vadd.f32 %v82, %v305
    %v307 = vpop.f32.mrf.mxu0
    %v308 = vadd.f32 %v86, %v307
    %v309 = vpop.f32.mrf.mxu0
    %v310 = vadd.f32 %v82, %v309
    %v311 = vpop.f32.mrf.mxu0
    %v312 = vadd.f32 %v86, %v311
    %313 = vmatprep.mubr.bf16.mxu0 0
    %314 = vmatmul.mubr.bf16.gmra.mxu0 %v108
    %v315 = vpop.f32.mrf.mxu0
    %v316 = vadd.f32 %v82, %v315
    %v317 = vpop.f32.mrf.mxu0
    %v318 = vadd.f32 %v86, %v317
    %v319 = vpop.f32.mrf.mxu0
    %v320 = vadd.f32 %v82, %v319
    %v321 = vpop.f32.mrf.mxu0
    %v322 = vadd.f32 %v86, %v321
    %323 = vdwg.mxu0
    %324 = vmatprep.subr.bf16.mxu0 %v238
    %325 = vmatpush1.bf16.msra.mxu0 %v237
    %326 = vmatprep.subr.bf16.mxu0 %v234
    %327 = vmatpush1.bf16.msra.mxu0 %v233
    %328 = vmatprep.subr.bf16.mxu0 %v230
    %329 = vmatpush1.bf16.msra.mxu0 %v229
    %330 = vmatprep.subr.bf16.mxu0 %v226
    %331 = vmatpush1.bf16.msra.mxu0 %v225
    %332 = vmatprep.subr.bf16.mxu0 %v222
    %333 = vmatpush1.bf16.msra.mxu0 %v221
    %334 = vmatprep.subr.bf16.mxu0 %v218
    %335 = vmatpush1.bf16.msra.mxu0 %v217
    %336 = vmatprep.subr.bf16.mxu0 %v214
    %337 = vmatpush1.bf16.msra.mxu0 %v213
    %338 = vmatprep.subr.bf16.mxu0 %v210
    %339 = vmatpush1.bf16.msra.mxu0 %v209
    %340 = vmatprep.subr.bf16.mxu0 0
    %341 = vmatpush2.bf16.msra.mxu0 0
    %342 = vmatprep.subr.bf16.mxu0 0
    %343 = vmatpush2.bf16.msra.mxu0 0
    %344 = vmatprep.subr.bf16.mxu0 0
    %345 = vmatpush2.bf16.msra.mxu0 0
    %346 = vmatprep.subr.bf16.mxu0 0
    %347 = vmatpush2.bf16.msra.mxu0 0
    %348 = vmatprep.subr.bf16.mxu0 0
    %349 = vmatpush2.bf16.msra.mxu0 0
    %350 = vmatprep.subr.bf16.mxu0 0
    %351 = vmatpush2.bf16.msra.mxu0 0
    %352 = vmatprep.subr.bf16.mxu0 0
    %353 = vmatpush2.bf16.msra.mxu0 0
    %354 = vmatprep.subr.bf16.mxu0 0
    %355 = vmatpush2.bf16.msra.mxu0 0
    %356 = vmatprep.mubr.bf16.mxu0 0
    %357 = vmatmul.mubr.bf16.gmra.mxu0 %v107
    %v358 = vpop.f32.mrf.mxu0
    %v359 = vadd.f32 %v90, %v358
    %v360 = vpop.f32.mrf.mxu0
    %v361 = vadd.f32 %v94, %v360
    %v362 = vpop.f32.mrf.mxu0
    %v363 = vadd.f32 %v90, %v362
    %v364 = vpop.f32.mrf.mxu0
    %v365 = vadd.f32 %v94, %v364
    %366 = vmatprep.mubr.bf16.mxu0 0
    %367 = vmatmul.mubr.bf16.gmra.mxu0 %v108
    %v368 = vpop.f32.mrf.mxu0
    %v369 = vadd.f32 %v90, %v368
    %v370 = vpop.f32.mrf.mxu0
    %v371 = vadd.f32 %v94, %v370
    %v372 = vpop.f32.mrf.mxu0
    %v373 = vadd.f32 %v90, %v372
    %v374 = vpop.f32.mrf.mxu0
    %v375 = vadd.f32 %v94, %v374
    %376 = vdwg.mxu0
    %vm377 = vcmp.ge.f32.partialorder %v306, 0.0
    %vm378 = vcmp.ge.f32.partialorder %v308, 0.0
    %vm379 = vcmp.ge.f32.partialorder %v359, 0.0
    %vm380 = vcmp.ge.f32.partialorder %v361, 0.0
    %vm381 = vcmp.ge.f32.partialorder %v310, 0.0
    %vm382 = vcmp.ge.f32.partialorder %v312, 0.0
    %vm383 = vcmp.ge.f32.partialorder %v363, 0.0
    %vm384 = vcmp.ge.f32.partialorder %v365, 0.0
    %vm385 = vcmp.ge.f32.partialorder %v316, 0.0
    %vm386 = vcmp.ge.f32.partialorder %v318, 0.0
    %vm387 = vcmp.ge.f32.partialorder %v369, 0.0
    %vm388 = vcmp.ge.f32.partialorder %v371, 0.0
    %vm389 = vcmp.ge.f32.partialorder %v320, 0.0
    %vm390 = vcmp.ge.f32.partialorder %v322, 0.0
    %vm391 = vcmp.ge.f32.partialorder %v373, 0.0
    %vm392 = vcmp.ge.f32.partialorder %v375, 0.0
    %v393 = vmul.f32 %v306, 0.2
    %v394 = vmul.f32 %v308, 0.2
    %v395 = vmul.f32 %v359, 0.2
    %v396 = vmul.f32 %v361, 0.2
    %v397 = vmul.f32 %v310, 0.2
    %v398 = vmul.f32 %v312, 0.2
    %v399 = vmul.f32 %v363, 0.2
    %v400 = vmul.f32 %v365, 0.2
    %v401 = vmul.f32 %v316, 0.2
    %v402 = vmul.f32 %v318, 0.2
    %v403 = vmul.f32 %v369, 0.2
    %v404 = vmul.f32 %v371, 0.2
    %v405 = vmul.f32 %v320, 0.2
    %v406 = vmul.f32 %v322, 0.2
    %v407 = vmul.f32 %v373, 0.2
    %v408 = vmul.f32 %v375, 0.2
    %v409 = vsel %vm377, %v306, %v393
    %v410 = vsel %vm378, %v308, %v394
    %v411 = vsel %vm379, %v359, %v395
    %v412 = vsel %vm380, %v361, %v396
    %v413 = vsel %vm381, %v310, %v397
    %v414 = vsel %vm382, %v312, %v398
    %v415 = vsel %vm383, %v363, %v399
    %v416 = vsel %vm384, %v365, %v400
    %v417 = vsel %vm385, %v316, %v401
    %v418 = vsel %vm386, %v318, %v402
    %v419 = vsel %vm387, %v369, %v403
    %v420 = vsel %vm388, %v371, %v404
    %v421 = vsel %vm389, %v320, %v405
    %v422 = vsel %vm390, %v322, %v406
    %v423 = vsel %vm391, %v373, %v407
    %v424 = vsel %vm392, %v375, %v408
    %v425 = vpack.c.bf16 %v413, %v409
    %v426 = vpack.c.bf16 %v414, %v410
    %v427 = vpack.c.bf16 %v415, %v411
    %v428 = vpack.c.bf16 %v416, %v412
    %v429 = vpack.c.bf16 %v421, %v417
    %v430 = vpack.c.bf16 %v422, %v418
    %v431 = vpack.c.bf16 %v423, %v419
    %v432 = vpack.c.bf16 %v424, %v420
    %v433 = vld [vmem:[%s3] sm:$0xff]
    %v434 = vld [vmem:[%s3 + $0x8] sm:$0xff]
    %v435 = vld [vmem:[%s3 + $0x10] sm:$0xff]
    %v436 = vld [vmem:[%s3 + $0x18] sm:$0xff]
    %v437 = vld [vmem:[%s3 + $0x20] sm:$0xff]
    %v438 = vld [vmem:[%s3 + $0x28] sm:$0xff]
    %v439 = vld [vmem:[%s3 + $0x30] sm:$0xff]
    %v440 = vld [vmem:[%s3 + $0x38] sm:$0xff]
    %v441 = vld [vmem:[%s3 + $0x40] sm:$0xff]
    %v442 = vld [vmem:[%s3 + $0x48] sm:$0xff]
    %v443 = vld [vmem:[%s3 + $0x50] sm:$0xff]
    %v444 = vld [vmem:[%s3 + $0x58] sm:$0xff]
    %v445 = vld [vmem:[%s3 + $0x60] sm:$0xff]
    %v446 = vld [vmem:[%s3 + $0x68] sm:$0xff]
    %v447 = vld [vmem:[%s3 + $0x70] sm:$0xff]
    %v448 = vld [vmem:[%s3 + $0x78] sm:$0xff]
    %v449 = vld [vmem:[%s3 + $0x80] sm:$0xff]
    %v450 = vld [vmem:[%s3 + $0x88] sm:$0xff]
    %v451 = vld [vmem:[%s3 + $0x90] sm:$0xff]
    %v452 = vld [vmem:[%s3 + $0x98] sm:$0xff]
    %v453 = vld [vmem:[%s3 + $0xa0] sm:$0xff]
    %v454 = vld [vmem:[%s3 + $0xa8] sm:$0xff]
    %v455 = vld [vmem:[%s3 + $0xb0] sm:$0xff]
    %v456 = vld [vmem:[%s3 + $0xb8] sm:$0xff]
    %v457 = vld [vmem:[%s3 + $0xc0] sm:$0xff]
    %v458 = vld [vmem:[%s3 + $0xc8] sm:$0xff]
    %v459 = vld [vmem:[%s3 + $0xd0] sm:$0xff]
    %v460 = vld [vmem:[%s3 + $0xd8] sm:$0xff]
    %v461 = vld [vmem:[%s3 + $0xe0] sm:$0xff]
    %v462 = vld [vmem:[%s3 + $0xe8] sm:$0xff]
    %v463 = vld [vmem:[%s3 + $0xf0] sm:$0xff]
    %v464 = vld [vmem:[%s3 + $0xf8] sm:$0xff]
    %v465 = vld [vmem:[%s3 + $0x100] sm:$0xff]
    %v466 = vld [vmem:[%s3 + $0x108] sm:$0xff]
    %v467 = vld [vmem:[%s3 + $0x110] sm:$0xff]
    %v468 = vld [vmem:[%s3 + $0x118] sm:$0xff]
    %v469 = vld [vmem:[%s3 + $0x120] sm:$0xff]
    %v470 = vld [vmem:[%s3 + $0x128] sm:$0xff]
    %v471 = vld [vmem:[%s3 + $0x130] sm:$0xff]
    %v472 = vld [vmem:[%s3 + $0x138] sm:$0xff]
    %v473 = vld [vmem:[%s3 + $0x140] sm:$0xff]
    %v474 = vld [vmem:[%s3 + $0x148] sm:$0xff]
    %v475 = vld [vmem:[%s3 + $0x150] sm:$0xff]
    %v476 = vld [vmem:[%s3 + $0x158] sm:$0xff]
    %v477 = vld [vmem:[%s3 + $0x160] sm:$0xff]
    %v478 = vld [vmem:[%s3 + $0x168] sm:$0xff]
    %v479 = vld [vmem:[%s3 + $0x170] sm:$0xff]
    %v480 = vld [vmem:[%s3 + $0x178] sm:$0xff]
    %v481 = vld [vmem:[%s3 + $0x180] sm:$0xff]
    %v482 = vld [vmem:[%s3 + $0x188] sm:$0xff]
    %v483 = vld [vmem:[%s3 + $0x190] sm:$0xff]
    %v484 = vld [vmem:[%s3 + $0x198] sm:$0xff]
    %v485 = vld [vmem:[%s3 + $0x1a0] sm:$0xff]
    %v486 = vld [vmem:[%s3 + $0x1a8] sm:$0xff]
    %v487 = vld [vmem:[%s3 + $0x1b0] sm:$0xff]
    %v488 = vld [vmem:[%s3 + $0x1b8] sm:$0xff]
    %v489 = vld [vmem:[%s3 + $0x1c0] sm:$0xff]
    %v490 = vld [vmem:[%s3 + $0x1c8] sm:$0xff]
    %v491 = vld [vmem:[%s3 + $0x1d0] sm:$0xff]
    %v492 = vld [vmem:[%s3 + $0x1d8] sm:$0xff]
    %v493 = vld [vmem:[%s3 + $0x1e0] sm:$0xff]
    %v494 = vld [vmem:[%s3 + $0x1e8] sm:$0xff]
    %v495 = vld [vmem:[%s3 + $0x1f0] sm:$0xff]
    %v496 = vld [vmem:[%s3 + $0x1f8] sm:$0xff]
    %v497 = vld [vmem:[%s3 + $0x200] sm:$0xff]
    %v498 = vld [vmem:[%s3 + $0x208] sm:$0xff]
    %v499 = vld [vmem:[%s3 + $0x210] sm:$0xff]
    %v500 = vld [vmem:[%s3 + $0x218] sm:$0xff]
    %v501 = vld [vmem:[%s3 + $0x220] sm:$0xff]
    %v502 = vld [vmem:[%s3 + $0x228] sm:$0xff]
    %v503 = vld [vmem:[%s3 + $0x230] sm:$0xff]
    %v504 = vld [vmem:[%s3 + $0x238] sm:$0xff]
    %v505 = vld [vmem:[%s3 + $0x240] sm:$0xff]
    %v506 = vld [vmem:[%s3 + $0x248] sm:$0xff]
    %v507 = vld [vmem:[%s3 + $0x250] sm:$0xff]
    %v508 = vld [vmem:[%s3 + $0x258] sm:$0xff]
    %v509 = vld [vmem:[%s3 + $0x260] sm:$0xff]
    %v510 = vld [vmem:[%s3 + $0x268] sm:$0xff]
    %v511 = vld [vmem:[%s3 + $0x270] sm:$0xff]
    %v512 = vld [vmem:[%s3 + $0x278] sm:$0xff]
    %v513 = vld [vmem:[%s3 + $0x280] sm:$0xff]
    %v514 = vld [vmem:[%s3 + $0x288] sm:$0xff]
    %v515 = vld [vmem:[%s3 + $0x290] sm:$0xff]
    %v516 = vld [vmem:[%s3 + $0x298] sm:$0xff]
    %v517 = vld [vmem:[%s3 + $0x2a0] sm:$0xff]
    %v518 = vld [vmem:[%s3 + $0x2a8] sm:$0xff]
    %v519 = vld [vmem:[%s3 + $0x2b0] sm:$0xff]
    %v520 = vld [vmem:[%s3 + $0x2b8] sm:$0xff]
    %v521 = vld [vmem:[%s3 + $0x2c0] sm:$0xff]
    %v522 = vld [vmem:[%s3 + $0x2c8] sm:$0xff]
    %v523 = vld [vmem:[%s3 + $0x2d0] sm:$0xff]
    %v524 = vld [vmem:[%s3 + $0x2d8] sm:$0xff]
    %v525 = vld [vmem:[%s3 + $0x2e0] sm:$0xff]
    %v526 = vld [vmem:[%s3 + $0x2e8] sm:$0xff]
    %v527 = vld [vmem:[%s3 + $0x2f0] sm:$0xff]
    %v528 = vld [vmem:[%s3 + $0x2f8] sm:$0xff]
    %v529 = vld [vmem:[%s3 + $0x300] sm:$0xff]
    %v530 = vld [vmem:[%s3 + $0x308] sm:$0xff]
    %v531 = vld [vmem:[%s3 + $0x310] sm:$0xff]
    %v532 = vld [vmem:[%s3 + $0x318] sm:$0xff]
    %v533 = vld [vmem:[%s3 + $0x320] sm:$0xff]
    %v534 = vld [vmem:[%s3 + $0x328] sm:$0xff]
    %v535 = vld [vmem:[%s3 + $0x330] sm:$0xff]
    %v536 = vld [vmem:[%s3 + $0x338] sm:$0xff]
    %v537 = vld [vmem:[%s3 + $0x340] sm:$0xff]
    %v538 = vld [vmem:[%s3 + $0x348] sm:$0xff]
    %v539 = vld [vmem:[%s3 + $0x350] sm:$0xff]
    %v540 = vld [vmem:[%s3 + $0x358] sm:$0xff]
    %v541 = vld [vmem:[%s3 + $0x360] sm:$0xff]
    %v542 = vld [vmem:[%s3 + $0x368] sm:$0xff]
    %v543 = vld [vmem:[%s3 + $0x370] sm:$0xff]
    %v544 = vld [vmem:[%s3 + $0x378] sm:$0xff]
    %v545 = vld [vmem:[%s3 + $0x380] sm:$0xff]
    %v546 = vld [vmem:[%s3 + $0x388] sm:$0xff]
    %v547 = vld [vmem:[%s3 + $0x390] sm:$0xff]
    %v548 = vld [vmem:[%s3 + $0x398] sm:$0xff]
    %v549 = vld [vmem:[%s3 + $0x3a0] sm:$0xff]
    %v550 = vld [vmem:[%s3 + $0x3a8] sm:$0xff]
    %v551 = vld [vmem:[%s3 + $0x3b0] sm:$0xff]
    %v552 = vld [vmem:[%s3 + $0x3b8] sm:$0xff]
    %v553 = vld [vmem:[%s3 + $0x3c0] sm:$0xff]
    %v554 = vld [vmem:[%s3 + $0x3c8] sm:$0xff]
    %v555 = vld [vmem:[%s3 + $0x3d0] sm:$0xff]
    %v556 = vld [vmem:[%s3 + $0x3d8] sm:$0xff]
    %v557 = vld [vmem:[%s3 + $0x3e0] sm:$0xff]
    %v558 = vld [vmem:[%s3 + $0x3e8] sm:$0xff]
    %v559 = vld [vmem:[%s3 + $0x3f0] sm:$0xff]
    %v560 = vld [vmem:[%s3 + $0x3f8] sm:$0xff]
    %v561 = vld [vmem:[%s4] sm:$0xf]
    %v563 = vlaneseq
    %v564 = vshrl.u32 %v563, 7
    %v565 = vsub.s32 0, %v564
    %v566 = vrot.slane %v561, %v565
    %v567 = vlaneseq
    %v568 = vshrl.u32 %v567, 7
    %v569 = vsub.s32 1, %v568
    %v570 = vrot.slane %v561, %v569
    %v571 = vlaneseq
    %v572 = vshrl.u32 %v571, 7
    %v573 = vsub.s32 2, %v572
    %v574 = vrot.slane %v561, %v573
    %v575 = vlaneseq
    %v576 = vshrl.u32 %v575, 7
    %v577 = vsub.s32 3, %v576
    %v578 = vrot.slane %v561, %v577
    %v711 = vunpack.c.l.b16 %v433
    %v712 = vunpack.c.h.b16 %v433
    %v713 = vunpack.c.l.b16 %v434
    %v714 = vunpack.c.h.b16 %v434
    %v715 = vunpack.c.l.b16 %v435
    %v716 = vunpack.c.h.b16 %v435
    %v717 = vunpack.c.l.b16 %v436
    %v718 = vunpack.c.h.b16 %v436
    %v719 = vunpack.c.l.b16 %v437
    %v720 = vunpack.c.h.b16 %v437
    %v721 = vunpack.c.l.b16 %v438
    %v722 = vunpack.c.h.b16 %v438
    %v723 = vunpack.c.l.b16 %v439
    %v724 = vunpack.c.h.b16 %v439
    %v725 = vunpack.c.l.b16 %v440
    %v726 = vunpack.c.h.b16 %v440
    %v727 = vunpack.c.l.b16 %v441
    %v728 = vunpack.c.h.b16 %v441
    %v729 = vunpack.c.l.b16 %v442
    %v730 = vunpack.c.h.b16 %v442
    %v731 = vunpack.c.l.b16 %v443
    %v732 = vunpack.c.h.b16 %v443
    %v733 = vunpack.c.l.b16 %v444
    %v734 = vunpack.c.h.b16 %v444
    %v735 = vunpack.c.l.b16 %v445
    %v736 = vunpack.c.h.b16 %v445
    %v737 = vunpack.c.l.b16 %v446
    %v738 = vunpack.c.h.b16 %v446
    %v739 = vunpack.c.l.b16 %v447
    %v740 = vunpack.c.h.b16 %v447
    %v741 = vunpack.c.l.b16 %v448
    %v742 = vunpack.c.h.b16 %v448
    %v743 = vunpack.c.l.b16 %v449
    %v744 = vunpack.c.h.b16 %v449
    %v745 = vunpack.c.l.b16 %v450
    %v746 = vunpack.c.h.b16 %v450
    %v747 = vunpack.c.l.b16 %v451
    %v748 = vunpack.c.h.b16 %v451
    %v749 = vunpack.c.l.b16 %v452
    %v750 = vunpack.c.h.b16 %v452
    %v751 = vunpack.c.l.b16 %v453
    %v752 = vunpack.c.h.b16 %v453
    %v753 = vunpack.c.l.b16 %v454
    %v754 = vunpack.c.h.b16 %v454
    %v755 = vunpack.c.l.b16 %v455
    %v756 = vunpack.c.h.b16 %v455
    %v757 = vunpack.c.l.b16 %v456
    %v758 = vunpack.c.h.b16 %v456
    %v759 = vunpack.c.l.b16 %v457
    %v760 = vunpack.c.h.b16 %v457
    %v761 = vunpack.c.l.b16 %v458
    %v762 = vunpack.c.h.b16 %v458
    %v763 = vunpack.c.l.b16 %v459
    %v764 = vunpack.c.h.b16 %v459
    %v765 = vunpack.c.l.b16 %v460
    %v766 = vunpack.c.h.b16 %v460
    %v767 = vunpack.c.l.b16 %v461
    %v768 = vunpack.c.h.b16 %v461
    %v769 = vunpack.c.l.b16 %v462
    %v770 = vunpack.c.h.b16 %v462
    %v771 = vunpack.c.l.b16 %v463
    %v772 = vunpack.c.h.b16 %v463
    %v773 = vunpack.c.l.b16 %v464
    %v774 = vunpack.c.h.b16 %v464
    %v775 = vunpack.c.l.b16 %v465
    %v776 = vunpack.c.h.b16 %v465
    %v777 = vunpack.c.l.b16 %v466
    %v778 = vunpack.c.h.b16 %v466
    %v779 = vunpack.c.l.b16 %v467
    %v780 = vunpack.c.h.b16 %v467
    %v781 = vunpack.c.l.b16 %v468
    %v782 = vunpack.c.h.b16 %v468
    %v783 = vunpack.c.l.b16 %v469
    %v784 = vunpack.c.h.b16 %v469
    %v785 = vunpack.c.l.b16 %v470
    %v786 = vunpack.c.h.b16 %v470
    %v787 = vunpack.c.l.b16 %v471
    %v788 = vunpack.c.h.b16 %v471
    %v789 = vunpack.c.l.b16 %v472
    %v790 = vunpack.c.h.b16 %v472
    %v791 = vunpack.c.l.b16 %v473
    %v792 = vunpack.c.h.b16 %v473
    %v793 = vunpack.c.l.b16 %v474
    %v794 = vunpack.c.h.b16 %v474
    %v795 = vunpack.c.l.b16 %v475
    %v796 = vunpack.c.h.b16 %v475
    %v797 = vunpack.c.l.b16 %v476
    %v798 = vunpack.c.h.b16 %v476
    %v799 = vunpack.c.l.b16 %v477
    %v800 = vunpack.c.h.b16 %v477
    %v801 = vunpack.c.l.b16 %v478
    %v802 = vunpack.c.h.b16 %v478
    %v803 = vunpack.c.l.b16 %v479
    %v804 = vunpack.c.h.b16 %v479
    %v805 = vunpack.c.l.b16 %v480
    %v806 = vunpack.c.h.b16 %v480
    %v807 = vunpack.c.l.b16 %v481
    %v808 = vunpack.c.h.b16 %v481
    %v809 = vunpack.c.l.b16 %v482
    %v810 = vunpack.c.h.b16 %v482
    %v811 = vunpack.c.l.b16 %v483
    %v812 = vunpack.c.h.b16 %v483
    %v813 = vunpack.c.l.b16 %v484
    %v814 = vunpack.c.h.b16 %v484
    %v815 = vunpack.c.l.b16 %v485
    %v816 = vunpack.c.h.b16 %v485
    %v817 = vunpack.c.l.b16 %v486
    %v818 = vunpack.c.h.b16 %v486
    %v819 = vunpack.c.l.b16 %v487
    %v820 = vunpack.c.h.b16 %v487
    %v821 = vunpack.c.l.b16 %v488
    %v822 = vunpack.c.h.b16 %v488
    %v823 = vunpack.c.l.b16 %v489
    %v824 = vunpack.c.h.b16 %v489
    %v825 = vunpack.c.l.b16 %v490
    %v826 = vunpack.c.h.b16 %v490
    %v827 = vunpack.c.l.b16 %v491
    %v828 = vunpack.c.h.b16 %v491
    %v829 = vunpack.c.l.b16 %v492
    %v830 = vunpack.c.h.b16 %v492
    %v831 = vunpack.c.l.b16 %v493
    %v832 = vunpack.c.h.b16 %v493
    %v833 = vunpack.c.l.b16 %v494
    %v834 = vunpack.c.h.b16 %v494
    %v835 = vunpack.c.l.b16 %v495
    %v836 = vunpack.c.h.b16 %v495
    %v837 = vunpack.c.l.b16 %v496
    %v838 = vunpack.c.h.b16 %v496
    %v839 = vunpack.c.l.b16 %v497
    %v840 = vunpack.c.h.b16 %v497
    %v841 = vunpack.c.l.b16 %v498
    %v842 = vunpack.c.h.b16 %v498
    %v843 = vunpack.c.l.b16 %v499
    %v844 = vunpack.c.h.b16 %v499
    %v845 = vunpack.c.l.b16 %v500
    %v846 = vunpack.c.h.b16 %v500
    %v847 = vunpack.c.l.b16 %v501
    %v848 = vunpack.c.h.b16 %v501
    %v849 = vunpack.c.l.b16 %v502
    %v850 = vunpack.c.h.b16 %v502
    %v851 = vunpack.c.l.b16 %v503
    %v852 = vunpack.c.h.b16 %v503
    %v853 = vunpack.c.l.b16 %v504
    %v854 = vunpack.c.h.b16 %v504
    %v855 = vunpack.c.l.b16 %v505
    %v856 = vunpack.c.h.b16 %v505
    %v857 = vunpack.c.l.b16 %v506
    %v858 = vunpack.c.h.b16 %v506
    %v859 = vunpack.c.l.b16 %v507
    %v860 = vunpack.c.h.b16 %v507
    %v861 = vunpack.c.l.b16 %v508
    %v862 = vunpack.c.h.b16 %v508
    %v863 = vunpack.c.l.b16 %v509
    %v864 = vunpack.c.h.b16 %v509
    %v865 = vunpack.c.l.b16 %v510
    %v866 = vunpack.c.h.b16 %v510
    %v867 = vunpack.c.l.b16 %v511
    %v868 = vunpack.c.h.b16 %v511
    %v869 = vunpack.c.l.b16 %v512
    %v870 = vunpack.c.h.b16 %v512
    %v871 = vunpack.c.l.b16 %v513
    %v872 = vunpack.c.h.b16 %v513
    %v873 = vunpack.c.l.b16 %v514
    %v874 = vunpack.c.h.b16 %v514
    %v875 = vunpack.c.l.b16 %v515
    %v876 = vunpack.c.h.b16 %v515
    %v877 = vunpack.c.l.b16 %v516
    %v878 = vunpack.c.h.b16 %v516
    %v879 = vunpack.c.l.b16 %v517
    %v880 = vunpack.c.h.b16 %v517
    %v881 = vunpack.c.l.b16 %v518
    %v882 = vunpack.c.h.b16 %v518
    %v883 = vunpack.c.l.b16 %v519
    %v884 = vunpack.c.h.b16 %v519
    %v885 = vunpack.c.l.b16 %v520
    %v886 = vunpack.c.h.b16 %v520
    %v887 = vunpack.c.l.b16 %v521
    %v888 = vunpack.c.h.b16 %v521
    %v889 = vunpack.c.l.b16 %v522
    %v890 = vunpack.c.h.b16 %v522
    %v891 = vunpack.c.l.b16 %v523
    %v892 = vunpack.c.h.b16 %v523
    %v893 = vunpack.c.l.b16 %v524
    %v894 = vunpack.c.h.b16 %v524
    %v895 = vunpack.c.l.b16 %v525
    %v896 = vunpack.c.h.b16 %v525
    %v897 = vunpack.c.l.b16 %v526
    %v898 = vunpack.c.h.b16 %v526
    %v899 = vunpack.c.l.b16 %v527
    %v900 = vunpack.c.h.b16 %v527
    %v901 = vunpack.c.l.b16 %v528
    %v902 = vunpack.c.h.b16 %v528
    %v903 = vunpack.c.l.b16 %v529
    %v904 = vunpack.c.h.b16 %v529
    %v905 = vunpack.c.l.b16 %v530
    %v906 = vunpack.c.h.b16 %v530
    %v907 = vunpack.c.l.b16 %v531
    %v908 = vunpack.c.h.b16 %v531
    %v909 = vunpack.c.l.b16 %v532
    %v910 = vunpack.c.h.b16 %v532
    %v911 = vunpack.c.l.b16 %v533
    %v912 = vunpack.c.h.b16 %v533
    %v913 = vunpack.c.l.b16 %v534
    %v914 = vunpack.c.h.b16 %v534
    %v915 = vunpack.c.l.b16 %v535
    %v916 = vunpack.c.h.b16 %v535
    %v917 = vunpack.c.l.b16 %v536
    %v918 = vunpack.c.h.b16 %v536
    %v919 = vunpack.c.l.b16 %v537
    %v920 = vunpack.c.h.b16 %v537
    %v921 = vunpack.c.l.b16 %v538
    %v922 = vunpack.c.h.b16 %v538
    %v923 = vunpack.c.l.b16 %v539
    %v924 = vunpack.c.h.b16 %v539
    %v925 = vunpack.c.l.b16 %v540
    %v926 = vunpack.c.h.b16 %v540
    %v927 = vunpack.c.l.b16 %v541
    %v928 = vunpack.c.h.b16 %v541
    %v929 = vunpack.c.l.b16 %v542
    %v930 = vunpack.c.h.b16 %v542
    %v931 = vunpack.c.l.b16 %v543
    %v932 = vunpack.c.h.b16 %v543
    %v933 = vunpack.c.l.b16 %v544
    %v934 = vunpack.c.h.b16 %v544
    %v935 = vunpack.c.l.b16 %v545
    %v936 = vunpack.c.h.b16 %v545
    %v937 = vunpack.c.l.b16 %v546
    %v938 = vunpack.c.h.b16 %v546
    %v939 = vunpack.c.l.b16 %v547
    %v940 = vunpack.c.h.b16 %v547
    %v941 = vunpack.c.l.b16 %v548
    %v942 = vunpack.c.h.b16 %v548
    %v943 = vunpack.c.l.b16 %v549
    %v944 = vunpack.c.h.b16 %v549
    %v945 = vunpack.c.l.b16 %v550
    %v946 = vunpack.c.h.b16 %v550
    %v947 = vunpack.c.l.b16 %v551
    %v948 = vunpack.c.h.b16 %v551
    %v949 = vunpack.c.l.b16 %v552
    %v950 = vunpack.c.h.b16 %v552
    %v951 = vunpack.c.l.b16 %v553
    %v952 = vunpack.c.h.b16 %v553
    %v953 = vunpack.c.l.b16 %v554
    %v954 = vunpack.c.h.b16 %v554
    %v955 = vunpack.c.l.b16 %v555
    %v956 = vunpack.c.h.b16 %v555
    %v957 = vunpack.c.l.b16 %v556
    %v958 = vunpack.c.h.b16 %v556
    %v959 = vunpack.c.l.b16 %v557
    %v960 = vunpack.c.h.b16 %v557
    %v961 = vunpack.c.l.b16 %v558
    %v962 = vunpack.c.h.b16 %v558
    %v963 = vunpack.c.l.b16 %v559
    %v964 = vunpack.c.h.b16 %v559
    %v965 = vunpack.c.l.b16 %v560
    %v966 = vunpack.c.h.b16 %v560
    %v967 = vpack.c.b16 %v715, %v711
    %v968 = vpack.c.b16 %v716, %v712
    %v969 = vpack.c.b16 %v717, %v713
    %v970 = vpack.c.b16 %v718, %v714
    %v971 = vpack.c.b16 %v723, %v719
    %v972 = vpack.c.b16 %v724, %v720
    %v973 = vpack.c.b16 %v725, %v721
    %v974 = vpack.c.b16 %v726, %v722
    %v975 = vpack.c.b16 %v731, %v727
    %v976 = vpack.c.b16 %v732, %v728
    %v977 = vpack.c.b16 %v733, %v729
    %v978 = vpack.c.b16 %v734, %v730
    %v979 = vpack.c.b16 %v739, %v735
    %v980 = vpack.c.b16 %v740, %v736
    %v981 = vpack.c.b16 %v741, %v737
    %v982 = vpack.c.b16 %v742, %v738
    %v983 = vpack.c.b16 %v747, %v743
    %v984 = vpack.c.b16 %v748, %v744
    %v985 = vpack.c.b16 %v749, %v745
    %v986 = vpack.c.b16 %v750, %v746
    %v987 = vpack.c.b16 %v755, %v751
    %v988 = vpack.c.b16 %v756, %v752
    %v989 = vpack.c.b16 %v757, %v753
    %v990 = vpack.c.b16 %v758, %v754
    %v991 = vpack.c.b16 %v763, %v759
    %v992 = vpack.c.b16 %v764, %v760
    %v993 = vpack.c.b16 %v765, %v761
    %v994 = vpack.c.b16 %v766, %v762
    %v995 = vpack.c.b16 %v771, %v767
    %v996 = vpack.c.b16 %v772, %v768
    %v997 = vpack.c.b16 %v773, %v769
    %v998 = vpack.c.b16 %v774, %v770
    %v999 = vpack.c.b16 %v779, %v775
    %v1000 = vpack.c.b16 %v780, %v776
    %v1001 = vpack.c.b16 %v781, %v777
    %v1002 = vpack.c.b16 %v782, %v778
    %v1003 = vpack.c.b16 %v787, %v783
    %v1004 = vpack.c.b16 %v788, %v784
    %v1005 = vpack.c.b16 %v789, %v785
    %v1006 = vpack.c.b16 %v790, %v786
    %v1007 = vpack.c.b16 %v795, %v791
    %v1008 = vpack.c.b16 %v796, %v792
    %v1009 = vpack.c.b16 %v797, %v793
    %v1010 = vpack.c.b16 %v798, %v794
    %v1011 = vpack.c.b16 %v803, %v799
    %v1012 = vpack.c.b16 %v804, %v800
    %v1013 = vpack.c.b16 %v805, %v801
    %v1014 = vpack.c.b16 %v806, %v802
    %v1015 = vpack.c.b16 %v811, %v807
    %v1016 = vpack.c.b16 %v812, %v808
    %v1017 = vpack.c.b16 %v813, %v809
    %v1018 = vpack.c.b16 %v814, %v810
    %v1019 = vpack.c.b16 %v819, %v815
    %v1020 = vpack.c.b16 %v820, %v816
    %v1021 = vpack.c.b16 %v821, %v817
    %v1022 = vpack.c.b16 %v822, %v818
    %v1023 = vpack.c.b16 %v827, %v823
    %v1024 = vpack.c.b16 %v828, %v824
    %v1025 = vpack.c.b16 %v829, %v825
    %v1026 = vpack.c.b16 %v830, %v826
    %v1027 = vpack.c.b16 %v835, %v831
    %v1028 = vpack.c.b16 %v836, %v832
    %v1029 = vpack.c.b16 %v837, %v833
    %v1030 = vpack.c.b16 %v838, %v834
    %v1031 = vpack.c.b16 %v843, %v839
    %v1032 = vpack.c.b16 %v844, %v840
    %v1033 = vpack.c.b16 %v845, %v841
    %v1034 = vpack.c.b16 %v846, %v842
    %v1035 = vpack.c.b16 %v851, %v847
    %v1036 = vpack.c.b16 %v852, %v848
    %v1037 = vpack.c.b16 %v853, %v849
    %v1038 = vpack.c.b16 %v854, %v850
    %v1039 = vpack.c.b16 %v859, %v855
    %v1040 = vpack.c.b16 %v860, %v856
    %v1041 = vpack.c.b16 %v861, %v857
    %v1042 = vpack.c.b16 %v862, %v858
    %v1043 = vpack.c.b16 %v867, %v863
    %v1044 = vpack.c.b16 %v868, %v864
    %v1045 = vpack.c.b16 %v869, %v865
    %v1046 = vpack.c.b16 %v870, %v866
    %v1047 = vpack.c.b16 %v875, %v871
    %v1048 = vpack.c.b16 %v876, %v872
    %v1049 = vpack.c.b16 %v877, %v873
    %v1050 = vpack.c.b16 %v878, %v874
    %v1051 = vpack.c.b16 %v883, %v879
    %v1052 = vpack.c.b16 %v884, %v880
    %v1053 = vpack.c.b16 %v885, %v881
    %v1054 = vpack.c.b16 %v886, %v882
    %v1055 = vpack.c.b16 %v891, %v887
    %v1056 = vpack.c.b16 %v892, %v888
    %v1057 = vpack.c.b16 %v893, %v889
    %v1058 = vpack.c.b16 %v894, %v890
    %v1059 = vpack.c.b16 %v899, %v895
    %v1060 = vpack.c.b16 %v900, %v896
    %v1061 = vpack.c.b16 %v901, %v897
    %v1062 = vpack.c.b16 %v902, %v898
    %v1063 = vpack.c.b16 %v907, %v903
    %v1064 = vpack.c.b16 %v908, %v904
    %v1065 = vpack.c.b16 %v909, %v905
    %v1066 = vpack.c.b16 %v910, %v906
    %v1067 = vpack.c.b16 %v915, %v911
    %v1068 = vpack.c.b16 %v916, %v912
    %v1069 = vpack.c.b16 %v917, %v913
    %v1070 = vpack.c.b16 %v918, %v914
    %v1071 = vpack.c.b16 %v923, %v919
    %v1072 = vpack.c.b16 %v924, %v920
    %v1073 = vpack.c.b16 %v925, %v921
    %v1074 = vpack.c.b16 %v926, %v922
    %v1075 = vpack.c.b16 %v931, %v927
    %v1076 = vpack.c.b16 %v932, %v928
    %v1077 = vpack.c.b16 %v933, %v929
    %v1078 = vpack.c.b16 %v934, %v930
    %v1079 = vpack.c.b16 %v939, %v935
    %v1080 = vpack.c.b16 %v940, %v936
    %v1081 = vpack.c.b16 %v941, %v937
    %v1082 = vpack.c.b16 %v942, %v938
    %v1083 = vpack.c.b16 %v947, %v943
    %v1084 = vpack.c.b16 %v948, %v944
    %v1085 = vpack.c.b16 %v949, %v945
    %v1086 = vpack.c.b16 %v950, %v946
    %v1087 = vpack.c.b16 %v955, %v951
    %v1088 = vpack.c.b16 %v956, %v952
    %v1089 = vpack.c.b16 %v957, %v953
    %v1090 = vpack.c.b16 %v958, %v954
    %v1091 = vpack.c.b16 %v963, %v959
    %v1092 = vpack.c.b16 %v964, %v960
    %v1093 = vpack.c.b16 %v965, %v961
    %v1094 = vpack.c.b16 %v966, %v962
    %1223 = vmatprep.subr.bf16.mxu0 %v996
    %1224 = vmatpush1.bf16.msra.mxu0 %v995
    %1225 = vmatprep.subr.bf16.mxu0 %v992
    %1226 = vmatpush1.bf16.msra.mxu0 %v991
    %1227 = vmatprep.subr.bf16.mxu0 %v988
    %1228 = vmatpush1.bf16.msra.mxu0 %v987
    %1229 = vmatprep.subr.bf16.mxu0 %v984
    %1230 = vmatpush1.bf16.msra.mxu0 %v983
    %1231 = vmatprep.subr.bf16.mxu0 %v980
    %1232 = vmatpush1.bf16.msra.mxu0 %v979
    %1233 = vmatprep.subr.bf16.mxu0 %v976
    %1234 = vmatpush1.bf16.msra.mxu0 %v975
    %1235 = vmatprep.subr.bf16.mxu0 %v972
    %1236 = vmatpush1.bf16.msra.mxu0 %v971
    %1237 = vmatprep.subr.bf16.mxu0 %v968
    %1238 = vmatpush1.bf16.msra.mxu0 %v967
    %1239 = vmatprep.subr.bf16.mxu0 %v1028
    %1240 = vmatpush2.bf16.msra.mxu0 %v1027
    %1241 = vmatprep.subr.bf16.mxu0 %v1024
    %1242 = vmatpush2.bf16.msra.mxu0 %v1023
    %1243 = vmatprep.subr.bf16.mxu0 %v1020
    %1244 = vmatpush2.bf16.msra.mxu0 %v1019
    %1245 = vmatprep.subr.bf16.mxu0 %v1016
    %1246 = vmatpush2.bf16.msra.mxu0 %v1015
    %1247 = vmatprep.subr.bf16.mxu0 %v1012
    %1248 = vmatpush2.bf16.msra.mxu0 %v1011
    %1249 = vmatprep.subr.bf16.mxu0 %v1008
    %1250 = vmatpush2.bf16.msra.mxu0 %v1007
    %1251 = vmatprep.subr.bf16.mxu0 %v1004
    %1252 = vmatpush2.bf16.msra.mxu0 %v1003
    %1253 = vmatprep.subr.bf16.mxu0 %v1000
    %1254 = vmatpush2.bf16.msra.mxu0 %v999
    %1255 = vmatprep.mubr.bf16.mxu0 %v426
    %1256 = vmatmul.mubr.bf16.gmra.mxu0 %v425
    %v1257 = vpop.f32.mrf.mxu0
    %v1258 = vadd.f32 %v566, %v1257
    %v1259 = vpop.f32.mrf.mxu0
    %v1260 = vadd.f32 %v570, %v1259
    %v1261 = vpop.f32.mrf.mxu0
    %v1262 = vadd.f32 %v566, %v1261
    %v1263 = vpop.f32.mrf.mxu0
    %v1264 = vadd.f32 %v570, %v1263
    %1265 = vmatprep.mubr.bf16.mxu0 %v430
    %1266 = vmatmul.mubr.bf16.gmra.mxu0 %v429
    %v1267 = vpop.f32.mrf.mxu0
    %v1268 = vadd.f32 %v566, %v1267
    %v1269 = vpop.f32.mrf.mxu0
    %v1270 = vadd.f32 %v570, %v1269
    %v1271 = vpop.f32.mrf.mxu0
    %v1272 = vadd.f32 %v566, %v1271
    %v1273 = vpop.f32.mrf.mxu0
    %v1274 = vadd.f32 %v570, %v1273
    %1275 = vdwg.mxu0
    %1276 = vmatprep.subr.bf16.mxu0 %v1060
    %1277 = vmatpush1.bf16.msra.mxu0 %v1059
    %1278 = vmatprep.subr.bf16.mxu0 %v1056
    %1279 = vmatpush1.bf16.msra.mxu0 %v1055
    %1280 = vmatprep.subr.bf16.mxu0 %v1052
    %1281 = vmatpush1.bf16.msra.mxu0 %v1051
    %1282 = vmatprep.subr.bf16.mxu0 %v1048
    %1283 = vmatpush1.bf16.msra.mxu0 %v1047
    %1284 = vmatprep.subr.bf16.mxu0 %v1044
    %1285 = vmatpush1.bf16.msra.mxu0 %v1043
    %1286 = vmatprep.subr.bf16.mxu0 %v1040
    %1287 = vmatpush1.bf16.msra.mxu0 %v1039
    %1288 = vmatprep.subr.bf16.mxu0 %v1036
    %1289 = vmatpush1.bf16.msra.mxu0 %v1035
    %1290 = vmatprep.subr.bf16.mxu0 %v1032
    %1291 = vmatpush1.bf16.msra.mxu0 %v1031
    %1292 = vmatprep.subr.bf16.mxu0 %v1092
    %1293 = vmatpush2.bf16.msra.mxu0 %v1091
    %1294 = vmatprep.subr.bf16.mxu0 %v1088
    %1295 = vmatpush2.bf16.msra.mxu0 %v1087
    %1296 = vmatprep.subr.bf16.mxu0 %v1084
    %1297 = vmatpush2.bf16.msra.mxu0 %v1083
    %1298 = vmatprep.subr.bf16.mxu0 %v1080
    %1299 = vmatpush2.bf16.msra.mxu0 %v1079
    %1300 = vmatprep.subr.bf16.mxu0 %v1076
    %1301 = vmatpush2.bf16.msra.mxu0 %v1075
    %1302 = vmatprep.subr.bf16.mxu0 %v1072
    %1303 = vmatpush2.bf16.msra.mxu0 %v1071
    %1304 = vmatprep.subr.bf16.mxu0 %v1068
    %1305 = vmatpush2.bf16.msra.mxu0 %v1067
    %1306 = vmatprep.subr.bf16.mxu0 %v1064
    %1307 = vmatpush2.bf16.msra.mxu0 %v1063
    %1308 = vmatprep.mubr.bf16.mxu0 %v428
    %1309 = vmatmul.mubr.bf16.gmra.mxu0 %v427
    %v1310 = vpop.f32.mrf.mxu0
    %v1311 = vadd.f32 %v1258, %v1310
    %v1312 = vpop.f32.mrf.mxu0
    %v1313 = vadd.f32 %v1260, %v1312
    %v1314 = vpop.f32.mrf.mxu0
    %v1315 = vadd.f32 %v1262, %v1314
    %v1316 = vpop.f32.mrf.mxu0
    %v1317 = vadd.f32 %v1264, %v1316
    %1318 = vmatprep.mubr.bf16.mxu0 %v432
    %1319 = vmatmul.mubr.bf16.gmra.mxu0 %v431
    %v1320 = vpop.f32.mrf.mxu0
    %v1321 = vadd.f32 %v1268, %v1320
    %v1322 = vpop.f32.mrf.mxu0
    %v1323 = vadd.f32 %v1270, %v1322
    %v1324 = vpop.f32.mrf.mxu0
    %v1325 = vadd.f32 %v1272, %v1324
    %v1326 = vpop.f32.mrf.mxu0
    %v1327 = vadd.f32 %v1274, %v1326
    %1328 = vdwg.mxu0
    %1329 = vmatprep.subr.bf16.mxu0 %v998
    %1330 = vmatpush1.bf16.msra.mxu0 %v997
    %1331 = vmatprep.subr.bf16.mxu0 %v994
    %1332 = vmatpush1.bf16.msra.mxu0 %v993
    %1333 = vmatprep.subr.bf16.mxu0 %v990
    %1334 = vmatpush1.bf16.msra.mxu0 %v989
    %1335 = vmatprep.subr.bf16.mxu0 %v986
    %1336 = vmatpush1.bf16.msra.mxu0 %v985
    %1337 = vmatprep.subr.bf16.mxu0 %v982
    %1338 = vmatpush1.bf16.msra.mxu0 %v981
    %1339 = vmatprep.subr.bf16.mxu0 %v978
    %1340 = vmatpush1.bf16.msra.mxu0 %v977
    %1341 = vmatprep.subr.bf16.mxu0 %v974
    %1342 = vmatpush1.bf16.msra.mxu0 %v973
    %1343 = vmatprep.subr.bf16.mxu0 %v970
    %1344 = vmatpush1.bf16.msra.mxu0 %v969
    %1345 = vmatprep.subr.bf16.mxu0 %v1030
    %1346 = vmatpush2.bf16.msra.mxu0 %v1029
    %1347 = vmatprep.subr.bf16.mxu0 %v1026
    %1348 = vmatpush2.bf16.msra.mxu0 %v1025
    %1349 = vmatprep.subr.bf16.mxu0 %v1022
    %1350 = vmatpush2.bf16.msra.mxu0 %v1021
    %1351 = vmatprep.subr.bf16.mxu0 %v1018
    %1352 = vmatpush2.bf16.msra.mxu0 %v1017
    %1353 = vmatprep.subr.bf16.mxu0 %v1014
    %1354 = vmatpush2.bf16.msra.mxu0 %v1013
    %1355 = vmatprep.subr.bf16.mxu0 %v1010
    %1356 = vmatpush2.bf16.msra.mxu0 %v1009
    %1357 = vmatprep.subr.bf16.mxu0 %v1006
    %1358 = vmatpush2.bf16.msra.mxu0 %v1005
    %1359 = vmatprep.subr.bf16.mxu0 %v1002
    %1360 = vmatpush2.bf16.msra.mxu0 %v1001
    %1361 = vmatprep.mubr.bf16.mxu0 %v426
    %1362 = vmatmul.mubr.bf16.gmra.mxu0 %v425
    %v1363 = vpop.f32.mrf.mxu0
    %v1364 = vadd.f32 %v574, %v1363
    %v1365 = vpop.f32.mrf.mxu0
    %v1366 = vadd.f32 %v578, %v1365
    %v1367 = vpop.f32.mrf.mxu0
    %v1368 = vadd.f32 %v574, %v1367
    %v1369 = vpop.f32.mrf.mxu0
    %v1370 = vadd.f32 %v578, %v1369
    %1371 = vmatprep.mubr.bf16.mxu0 %v430
    %1372 = vmatmul.mubr.bf16.gmra.mxu0 %v429
    %v1373 = vpop.f32.mrf.mxu0
    %v1374 = vadd.f32 %v574, %v1373
    %v1375 = vpop.f32.mrf.mxu0
    %v1376 = vadd.f32 %v578, %v1375
    %v1377 = vpop.f32.mrf.mxu0
    %v1378 = vadd.f32 %v574, %v1377
    %v1379 = vpop.f32.mrf.mxu0
    %v1380 = vadd.f32 %v578, %v1379
    %1381 = vdwg.mxu0
    %1382 = vmatprep.subr.bf16.mxu0 %v1062
    %1383 = vmatpush1.bf16.msra.mxu0 %v1061
    %1384 = vmatprep.subr.bf16.mxu0 %v1058
    %1385 = vmatpush1.bf16.msra.mxu0 %v1057
    %1386 = vmatprep.subr.bf16.mxu0 %v1054
    %1387 = vmatpush1.bf16.msra.mxu0 %v1053
    %1388 = vmatprep.subr.bf16.mxu0 %v1050
    %1389 = vmatpush1.bf16.msra.mxu0 %v1049
    %1390 = vmatprep.subr.bf16.mxu0 %v1046
    %1391 = vmatpush1.bf16.msra.mxu0 %v1045
    %1392 = vmatprep.subr.bf16.mxu0 %v1042
    %1393 = vmatpush1.bf16.msra.mxu0 %v1041
    %1394 = vmatprep.subr.bf16.mxu0 %v1038
    %1395 = vmatpush1.bf16.msra.mxu0 %v1037
    %1396 = vmatprep.subr.bf16.mxu0 %v1034
    %1397 = vmatpush1.bf16.msra.mxu0 %v1033
    %1398 = vmatprep.subr.bf16.mxu0 %v1094
    %1399 = vmatpush2.bf16.msra.mxu0 %v1093
    %1400 = vmatprep.subr.bf16.mxu0 %v1090
    %1401 = vmatpush2.bf16.msra.mxu0 %v1089
    %1402 = vmatprep.subr.bf16.mxu0 %v1086
    %1403 = vmatpush2.bf16.msra.mxu0 %v1085
    %1404 = vmatprep.subr.bf16.mxu0 %v1082
    %1405 = vmatpush2.bf16.msra.mxu0 %v1081
    %1406 = vmatprep.subr.bf16.mxu0 %v1078
    %1407 = vmatpush2.bf16.msra.mxu0 %v1077
    %1408 = vmatprep.subr.bf16.mxu0 %v1074
    %1409 = vmatpush2.bf16.msra.mxu0 %v1073
    %1410 = vmatprep.subr.bf16.mxu0 %v1070
    %1411 = vmatpush2.bf16.msra.mxu0 %v1069
    %1412 = vmatprep.subr.bf16.mxu0 %v1066
    %1413 = vmatpush2.bf16.msra.mxu0 %v1065
    %1414 = vmatprep.mubr.bf16.mxu0 %v428
    %1415 = vmatmul.mubr.bf16.gmra.mxu0 %v427
    %v1416 = vpop.f32.mrf.mxu0
    %v1417 = vadd.f32 %v1364, %v1416
    %v1418 = vpop.f32.mrf.mxu0
    %v1419 = vadd.f32 %v1366, %v1418
    %v1420 = vpop.f32.mrf.mxu0
    %v1421 = vadd.f32 %v1368, %v1420
    %v1422 = vpop.f32.mrf.mxu0
    %v1423 = vadd.f32 %v1370, %v1422
    %1424 = vmatprep.mubr.bf16.mxu0 %v432
    %1425 = vmatmul.mubr.bf16.gmra.mxu0 %v431
    %v1426 = vpop.f32.mrf.mxu0
    %v1427 = vadd.f32 %v1374, %v1426
    %v1428 = vpop.f32.mrf.mxu0
    %v1429 = vadd.f32 %v1376, %v1428
    %v1430 = vpop.f32.mrf.mxu0
    %v1431 = vadd.f32 %v1378, %v1430
    %v1432 = vpop.f32.mrf.mxu0
    %v1433 = vadd.f32 %v1380, %v1432
    %1434 = vdwg.mxu0
    %v1435 = vpack.c.bf16 %v1315, %v1311
    %v1436 = vpack.c.bf16 %v1317, %v1313
    %v1437 = vpack.c.bf16 %v1421, %v1417
    %v1438 = vpack.c.bf16 %v1423, %v1419
    %v1439 = vpack.c.bf16 %v1325, %v1321
    %v1440 = vpack.c.bf16 %v1327, %v1323
    %v1441 = vpack.c.bf16 %v1431, %v1427
    %v1442 = vpack.c.bf16 %v1433, %v1429
    %v1443 = vld [vmem:[%s5] sm:$0xf]
    %v1444 = vld [vmem:[%s5 + $0x4] sm:$0xf]
    %v1445 = vld [vmem:[%s5 + $0x8] sm:$0xf]
    %v1446 = vld [vmem:[%s5 + $0xc] sm:$0xf]
    %v1447 = vld [vmem:[%s6] sm:$0xff]
    %v1448 = vld [vmem:[%s6 + $0x8] sm:$0xff]
    %v1449 = vld [vmem:[%s6 + $0x10] sm:$0xff]
    %v1450 = vld [vmem:[%s6 + $0x18] sm:$0xff]
    %v1451 = vld [vmem:[%s6 + $0x20] sm:$0xff]
    %v1452 = vld [vmem:[%s6 + $0x28] sm:$0xff]
    %v1453 = vld [vmem:[%s6 + $0x30] sm:$0xff]
    %v1454 = vld [vmem:[%s6 + $0x38] sm:$0xff]
    %v1455 = vld [vmem:[%s6 + $0x40] sm:$0xff]
    %v1456 = vld [vmem:[%s6 + $0x48] sm:$0xff]
    %v1457 = vld [vmem:[%s6 + $0x50] sm:$0xff]
    %v1458 = vld [vmem:[%s6 + $0x58] sm:$0xff]
    %v1459 = vld [vmem:[%s6 + $0x60] sm:$0xff]
    %v1460 = vld [vmem:[%s6 + $0x68] sm:$0xff]
    %v1461 = vld [vmem:[%s6 + $0x70] sm:$0xff]
    %v1462 = vld [vmem:[%s6 + $0x78] sm:$0xff]
    %v1463 = vld [vmem:[%s6 + $0x80] sm:$0xff]
    %v1464 = vld [vmem:[%s6 + $0x88] sm:$0xff]
    %v1465 = vld [vmem:[%s6 + $0x90] sm:$0xff]
    %v1466 = vld [vmem:[%s6 + $0x98] sm:$0xff]
    %v1467 = vld [vmem:[%s6 + $0xa0] sm:$0xff]
    %v1468 = vld [vmem:[%s6 + $0xa8] sm:$0xff]
    %v1469 = vld [vmem:[%s6 + $0xb0] sm:$0xff]
    %v1470 = vld [vmem:[%s6 + $0xb8] sm:$0xff]
    %v1471 = vld [vmem:[%s6 + $0xc0] sm:$0xff]
    %v1472 = vld [vmem:[%s6 + $0xc8] sm:$0xff]
    %v1473 = vld [vmem:[%s6 + $0xd0] sm:$0xff]
    %v1474 = vld [vmem:[%s6 + $0xd8] sm:$0xff]
    %v1475 = vld [vmem:[%s6 + $0xe0] sm:$0xff]
    %v1476 = vld [vmem:[%s6 + $0xe8] sm:$0xff]
    %v1477 = vld [vmem:[%s6 + $0xf0] sm:$0xff]
    %v1478 = vld [vmem:[%s6 + $0xf8] sm:$0xff]
    %v1479 = vld [vmem:[%s7] sm:$0xf]
    %v1481 = vlaneseq
    %v1482 = vshrl.u32 %v1481, 7
    %v1483 = vsub.s32 0, %v1482
    %v1484 = vrot.slane %v1479, %v1483
    %v1485 = vlaneseq
    %v1486 = vshrl.u32 %v1485, 7
    %v1487 = vsub.s32 1, %v1486
    %v1488 = vrot.slane %v1479, %v1487
    %v1489 = vlaneseq
    %v1490 = vshrl.u32 %v1489, 7
    %v1491 = vsub.s32 2, %v1490
    %v1492 = vrot.slane %v1479, %v1491
    %v1493 = vlaneseq
    %v1494 = vshrl.u32 %v1493, 7
    %v1495 = vsub.s32 3, %v1494
    %v1496 = vrot.slane %v1479, %v1495
    %v1505 = vunpack.c.l.b16 %v1443
    %v1506 = vunpack.c.l.b16 %v1444
    %v1507 = vunpack.c.l.b16 %v1445
    %v1508 = vunpack.c.l.b16 %v1446
    %v1509 = vpack.c.b16 %v1506, %v1505
    %v1510 = vpack.c.b16 %v1508, %v1507
    %v1545 = vunpack.c.l.b16 %v1447
    %v1546 = vunpack.c.h.b16 %v1447
    %v1547 = vunpack.c.l.b16 %v1448
    %v1548 = vunpack.c.h.b16 %v1448
    %v1549 = vunpack.c.l.b16 %v1449
    %v1550 = vunpack.c.h.b16 %v1449
    %v1551 = vunpack.c.l.b16 %v1450
    %v1552 = vunpack.c.h.b16 %v1450
    %v1553 = vunpack.c.l.b16 %v1451
    %v1554 = vunpack.c.h.b16 %v1451
    %v1555 = vunpack.c.l.b16 %v1452
    %v1556 = vunpack.c.h.b16 %v1452
    %v1557 = vunpack.c.l.b16 %v1453
    %v1558 = vunpack.c.h.b16 %v1453
    %v1559 = vunpack.c.l.b16 %v1454
    %v1560 = vunpack.c.h.b16 %v1454
    %v1561 = vunpack.c.l.b16 %v1455
    %v1562 = vunpack.c.h.b16 %v1455
    %v1563 = vunpack.c.l.b16 %v1456
    %v1564 = vunpack.c.h.b16 %v1456
    %v1565 = vunpack.c.l.b16 %v1457
    %v1566 = vunpack.c.h.b16 %v1457
    %v1567 = vunpack.c.l.b16 %v1458
    %v1568 = vunpack.c.h.b16 %v1458
    %v1569 = vunpack.c.l.b16 %v1459
    %v1570 = vunpack.c.h.b16 %v1459
    %v1571 = vunpack.c.l.b16 %v1460
    %v1572 = vunpack.c.h.b16 %v1460
    %v1573 = vunpack.c.l.b16 %v1461
    %v1574 = vunpack.c.h.b16 %v1461
    %v1575 = vunpack.c.l.b16 %v1462
    %v1576 = vunpack.c.h.b16 %v1462
    %v1577 = vunpack.c.l.b16 %v1463
    %v1578 = vunpack.c.h.b16 %v1463
    %v1579 = vunpack.c.l.b16 %v1464
    %v1580 = vunpack.c.h.b16 %v1464
    %v1581 = vunpack.c.l.b16 %v1465
    %v1582 = vunpack.c.h.b16 %v1465
    %v1583 = vunpack.c.l.b16 %v1466
    %v1584 = vunpack.c.h.b16 %v1466
    %v1585 = vunpack.c.l.b16 %v1467
    %v1586 = vunpack.c.h.b16 %v1467
    %v1587 = vunpack.c.l.b16 %v1468
    %v1588 = vunpack.c.h.b16 %v1468
    %v1589 = vunpack.c.l.b16 %v1469
    %v1590 = vunpack.c.h.b16 %v1469
    %v1591 = vunpack.c.l.b16 %v1470
    %v1592 = vunpack.c.h.b16 %v1470
    %v1593 = vunpack.c.l.b16 %v1471
    %v1594 = vunpack.c.h.b16 %v1471
    %v1595 = vunpack.c.l.b16 %v1472
    %v1596 = vunpack.c.h.b16 %v1472
    %v1597 = vunpack.c.l.b16 %v1473
    %v1598 = vunpack.c.h.b16 %v1473
    %v1599 = vunpack.c.l.b16 %v1474
    %v1600 = vunpack.c.h.b16 %v1474
    %v1601 = vunpack.c.l.b16 %v1475
    %v1602 = vunpack.c.h.b16 %v1475
    %v1603 = vunpack.c.l.b16 %v1476
    %v1604 = vunpack.c.h.b16 %v1476
    %v1605 = vunpack.c.l.b16 %v1477
    %v1606 = vunpack.c.h.b16 %v1477
    %v1607 = vunpack.c.l.b16 %v1478
    %v1608 = vunpack.c.h.b16 %v1478
    %v1609 = vpack.c.b16 %v1549, %v1545
    %v1610 = vpack.c.b16 %v1550, %v1546
    %v1611 = vpack.c.b16 %v1551, %v1547
    %v1612 = vpack.c.b16 %v1552, %v1548
    %v1613 = vpack.c.b16 %v1557, %v1553
    %v1614 = vpack.c.b16 %v1558, %v1554
    %v1615 = vpack.c.b16 %v1559, %v1555
    %v1616 = vpack.c.b16 %v1560, %v1556
    %v1617 = vpack.c.b16 %v1565, %v1561
    %v1618 = vpack.c.b16 %v1566, %v1562
    %v1619 = vpack.c.b16 %v1567, %v1563
    %v1620 = vpack.c.b16 %v1568, %v1564
    %v1621 = vpack.c.b16 %v1573, %v1569
    %v1622 = vpack.c.b16 %v1574, %v1570
    %v1623 = vpack.c.b16 %v1575, %v1571
    %v1624 = vpack.c.b16 %v1576, %v1572
    %v1625 = vpack.c.b16 %v1581, %v1577
    %v1626 = vpack.c.b16 %v1582, %v1578
    %v1627 = vpack.c.b16 %v1583, %v1579
    %v1628 = vpack.c.b16 %v1584, %v1580
    %v1629 = vpack.c.b16 %v1589, %v1585
    %v1630 = vpack.c.b16 %v1590, %v1586
    %v1631 = vpack.c.b16 %v1591, %v1587
    %v1632 = vpack.c.b16 %v1592, %v1588
    %v1633 = vpack.c.b16 %v1597, %v1593
    %v1634 = vpack.c.b16 %v1598, %v1594
    %v1635 = vpack.c.b16 %v1599, %v1595
    %v1636 = vpack.c.b16 %v1600, %v1596
    %v1637 = vpack.c.b16 %v1605, %v1601
    %v1638 = vpack.c.b16 %v1606, %v1602
    %v1639 = vpack.c.b16 %v1607, %v1603
    %v1640 = vpack.c.b16 %v1608, %v1604
    %1673 = vmatprep.subr.bf16.mxu0 %v1638
    %1674 = vmatpush1.bf16.msra.mxu0 %v1637
    %1675 = vmatprep.subr.bf16.mxu0 %v1634
    %1676 = vmatpush1.bf16.msra.mxu0 %v1633
    %1677 = vmatprep.subr.bf16.mxu0 %v1630
    %1678 = vmatpush1.bf16.msra.mxu0 %v1629
    %1679 = vmatprep.subr.bf16.mxu0 %v1626
    %1680 = vmatpush1.bf16.msra.mxu0 %v1625
    %1681 = vmatprep.subr.bf16.mxu0 %v1622
    %1682 = vmatpush1.bf16.msra.mxu0 %v1621
    %1683 = vmatprep.subr.bf16.mxu0 %v1618
    %1684 = vmatpush1.bf16.msra.mxu0 %v1617
    %1685 = vmatprep.subr.bf16.mxu0 %v1614
    %1686 = vmatpush1.bf16.msra.mxu0 %v1613
    %1687 = vmatprep.subr.bf16.mxu0 %v1610
    %1688 = vmatpush1.bf16.msra.mxu0 %v1609
    %1689 = vmatprep.subr.bf16.mxu0 0
    %1690 = vmatpush2.bf16.msra.mxu0 0
    %1691 = vmatprep.subr.bf16.mxu0 0
    %1692 = vmatpush2.bf16.msra.mxu0 0
    %1693 = vmatprep.subr.bf16.mxu0 0
    %1694 = vmatpush2.bf16.msra.mxu0 0
    %1695 = vmatprep.subr.bf16.mxu0 0
    %1696 = vmatpush2.bf16.msra.mxu0 0
    %1697 = vmatprep.subr.bf16.mxu0 0
    %1698 = vmatpush2.bf16.msra.mxu0 0
    %1699 = vmatprep.subr.bf16.mxu0 0
    %1700 = vmatpush2.bf16.msra.mxu0 0
    %1701 = vmatprep.subr.bf16.mxu0 0
    %1702 = vmatpush2.bf16.msra.mxu0 0
    %1703 = vmatprep.subr.bf16.mxu0 0
    %1704 = vmatpush2.bf16.msra.mxu0 0
    %1705 = vmatprep.mubr.bf16.mxu0 0
    %1706 = vmatmul.mubr.bf16.gmra.mxu0 %v1509
    %v1707 = vpop.f32.mrf.mxu0
    %v1708 = vadd.f32 %v1484, %v1707
    %v1709 = vpop.f32.mrf.mxu0
    %v1710 = vadd.f32 %v1488, %v1709
    %v1711 = vpop.f32.mrf.mxu0
    %v1712 = vadd.f32 %v1484, %v1711
    %v1713 = vpop.f32.mrf.mxu0
    %v1714 = vadd.f32 %v1488, %v1713
    %1715 = vmatprep.mubr.bf16.mxu0 0
    %1716 = vmatmul.mubr.bf16.gmra.mxu0 %v1510
    %v1717 = vpop.f32.mrf.mxu0
    %v1718 = vadd.f32 %v1484, %v1717
    %v1719 = vpop.f32.mrf.mxu0
    %v1720 = vadd.f32 %v1488, %v1719
    %v1721 = vpop.f32.mrf.mxu0
    %v1722 = vadd.f32 %v1484, %v1721
    %v1723 = vpop.f32.mrf.mxu0
    %v1724 = vadd.f32 %v1488, %v1723
    %1725 = vdwg.mxu0
    %1726 = vmatprep.subr.bf16.mxu0 %v1640
    %1727 = vmatpush1.bf16.msra.mxu0 %v1639
    %1728 = vmatprep.subr.bf16.mxu0 %v1636
    %1729 = vmatpush1.bf16.msra.mxu0 %v1635
    %1730 = vmatprep.subr.bf16.mxu0 %v1632
    %1731 = vmatpush1.bf16.msra.mxu0 %v1631
    %1732 = vmatprep.subr.bf16.mxu0 %v1628
    %1733 = vmatpush1.bf16.msra.mxu0 %v1627
    %1734 = vmatprep.subr.bf16.mxu0 %v1624
    %1735 = vmatpush1.bf16.msra.mxu0 %v1623
    %1736 = vmatprep.subr.bf16.mxu0 %v1620
    %1737 = vmatpush1.bf16.msra.mxu0 %v1619
    %1738 = vmatprep.subr.bf16.mxu0 %v1616
    %1739 = vmatpush1.bf16.msra.mxu0 %v1615
    %1740 = vmatprep.subr.bf16.mxu0 %v1612
    %1741 = vmatpush1.bf16.msra.mxu0 %v1611
    %1742 = vmatprep.subr.bf16.mxu0 0
    %1743 = vmatpush2.bf16.msra.mxu0 0
    %1744 = vmatprep.subr.bf16.mxu0 0
    %1745 = vmatpush2.bf16.msra.mxu0 0
    %1746 = vmatprep.subr.bf16.mxu0 0
    %1747 = vmatpush2.bf16.msra.mxu0 0
    %1748 = vmatprep.subr.bf16.mxu0 0
    %1749 = vmatpush2.bf16.msra.mxu0 0
    %1750 = vmatprep.subr.bf16.mxu0 0
    %1751 = vmatpush2.bf16.msra.mxu0 0
    %1752 = vmatprep.subr.bf16.mxu0 0
    %1753 = vmatpush2.bf16.msra.mxu0 0
    %1754 = vmatprep.subr.bf16.mxu0 0
    %1755 = vmatpush2.bf16.msra.mxu0 0
    %1756 = vmatprep.subr.bf16.mxu0 0
    %1757 = vmatpush2.bf16.msra.mxu0 0
    %1758 = vmatprep.mubr.bf16.mxu0 0
    %1759 = vmatmul.mubr.bf16.gmra.mxu0 %v1509
    %v1760 = vpop.f32.mrf.mxu0
    %v1761 = vadd.f32 %v1492, %v1760
    %v1762 = vpop.f32.mrf.mxu0
    %v1763 = vadd.f32 %v1496, %v1762
    %v1764 = vpop.f32.mrf.mxu0
    %v1765 = vadd.f32 %v1492, %v1764
    %v1766 = vpop.f32.mrf.mxu0
    %v1767 = vadd.f32 %v1496, %v1766
    %1768 = vmatprep.mubr.bf16.mxu0 0
    %1769 = vmatmul.mubr.bf16.gmra.mxu0 %v1510
    %v1770 = vpop.f32.mrf.mxu0
    %v1771 = vadd.f32 %v1492, %v1770
    %v1772 = vpop.f32.mrf.mxu0
    %v1773 = vadd.f32 %v1496, %v1772
    %v1774 = vpop.f32.mrf.mxu0
    %v1775 = vadd.f32 %v1492, %v1774
    %v1776 = vpop.f32.mrf.mxu0
    %v1777 = vadd.f32 %v1496, %v1776
    %1778 = vdwg.mxu0
    %vm1779 = vcmp.ge.f32.partialorder %v1708, 0.0
    %vm1780 = vcmp.ge.f32.partialorder %v1710, 0.0
    %vm1781 = vcmp.ge.f32.partialorder %v1761, 0.0
    %vm1782 = vcmp.ge.f32.partialorder %v1763, 0.0
    %vm1783 = vcmp.ge.f32.partialorder %v1712, 0.0
    %vm1784 = vcmp.ge.f32.partialorder %v1714, 0.0
    %vm1785 = vcmp.ge.f32.partialorder %v1765, 0.0
    %vm1786 = vcmp.ge.f32.partialorder %v1767, 0.0
    %vm1787 = vcmp.ge.f32.partialorder %v1718, 0.0
    %vm1788 = vcmp.ge.f32.partialorder %v1720, 0.0
    %vm1789 = vcmp.ge.f32.partialorder %v1771, 0.0
    %vm1790 = vcmp.ge.f32.partialorder %v1773, 0.0
    %vm1791 = vcmp.ge.f32.partialorder %v1722, 0.0
    %vm1792 = vcmp.ge.f32.partialorder %v1724, 0.0
    %vm1793 = vcmp.ge.f32.partialorder %v1775, 0.0
    %vm1794 = vcmp.ge.f32.partialorder %v1777, 0.0
    %v1795 = vmul.f32 %v1708, 0.2
    %v1796 = vmul.f32 %v1710, 0.2
    %v1797 = vmul.f32 %v1761, 0.2
    %v1798 = vmul.f32 %v1763, 0.2
    %v1799 = vmul.f32 %v1712, 0.2
    %v1800 = vmul.f32 %v1714, 0.2
    %v1801 = vmul.f32 %v1765, 0.2
    %v1802 = vmul.f32 %v1767, 0.2
    %v1803 = vmul.f32 %v1718, 0.2
    %v1804 = vmul.f32 %v1720, 0.2
    %v1805 = vmul.f32 %v1771, 0.2
    %v1806 = vmul.f32 %v1773, 0.2
    %v1807 = vmul.f32 %v1722, 0.2
    %v1808 = vmul.f32 %v1724, 0.2
    %v1809 = vmul.f32 %v1775, 0.2
    %v1810 = vmul.f32 %v1777, 0.2
    %v1811 = vsel %vm1779, %v1708, %v1795
    %v1812 = vsel %vm1780, %v1710, %v1796
    %v1813 = vsel %vm1781, %v1761, %v1797
    %v1814 = vsel %vm1782, %v1763, %v1798
    %v1815 = vsel %vm1783, %v1712, %v1799
    %v1816 = vsel %vm1784, %v1714, %v1800
    %v1817 = vsel %vm1785, %v1765, %v1801
    %v1818 = vsel %vm1786, %v1767, %v1802
    %v1819 = vsel %vm1787, %v1718, %v1803
    %v1820 = vsel %vm1788, %v1720, %v1804
    %v1821 = vsel %vm1789, %v1771, %v1805
    %v1822 = vsel %vm1790, %v1773, %v1806
    %v1823 = vsel %vm1791, %v1722, %v1807
    %v1824 = vsel %vm1792, %v1724, %v1808
    %v1825 = vsel %vm1793, %v1775, %v1809
    %v1826 = vsel %vm1794, %v1777, %v1810
    %v1827 = vpack.c.bf16 %v1815, %v1811
    %v1828 = vpack.c.bf16 %v1816, %v1812
    %v1829 = vpack.c.bf16 %v1817, %v1813
    %v1830 = vpack.c.bf16 %v1818, %v1814
    %v1831 = vpack.c.bf16 %v1823, %v1819
    %v1832 = vpack.c.bf16 %v1824, %v1820
    %v1833 = vpack.c.bf16 %v1825, %v1821
    %v1834 = vpack.c.bf16 %v1826, %v1822
    %v1835 = vld [vmem:[%s8] sm:$0xff]
    %v1836 = vld [vmem:[%s8 + $0x8] sm:$0xff]
    %v1837 = vld [vmem:[%s8 + $0x10] sm:$0xff]
    %v1838 = vld [vmem:[%s8 + $0x18] sm:$0xff]
    %v1839 = vld [vmem:[%s8 + $0x20] sm:$0xff]
    %v1840 = vld [vmem:[%s8 + $0x28] sm:$0xff]
    %v1841 = vld [vmem:[%s8 + $0x30] sm:$0xff]
    %v1842 = vld [vmem:[%s8 + $0x38] sm:$0xff]
    %v1843 = vld [vmem:[%s8 + $0x40] sm:$0xff]
    %v1844 = vld [vmem:[%s8 + $0x48] sm:$0xff]
    %v1845 = vld [vmem:[%s8 + $0x50] sm:$0xff]
    %v1846 = vld [vmem:[%s8 + $0x58] sm:$0xff]
    %v1847 = vld [vmem:[%s8 + $0x60] sm:$0xff]
    %v1848 = vld [vmem:[%s8 + $0x68] sm:$0xff]
    %v1849 = vld [vmem:[%s8 + $0x70] sm:$0xff]
    %v1850 = vld [vmem:[%s8 + $0x78] sm:$0xff]
    %v1851 = vld [vmem:[%s8 + $0x80] sm:$0xff]
    %v1852 = vld [vmem:[%s8 + $0x88] sm:$0xff]
    %v1853 = vld [vmem:[%s8 + $0x90] sm:$0xff]
    %v1854 = vld [vmem:[%s8 + $0x98] sm:$0xff]
    %v1855 = vld [vmem:[%s8 + $0xa0] sm:$0xff]
    %v1856 = vld [vmem:[%s8 + $0xa8] sm:$0xff]
    %v1857 = vld [vmem:[%s8 + $0xb0] sm:$0xff]
    %v1858 = vld [vmem:[%s8 + $0xb8] sm:$0xff]
    %v1859 = vld [vmem:[%s8 + $0xc0] sm:$0xff]
    %v1860 = vld [vmem:[%s8 + $0xc8] sm:$0xff]
    %v1861 = vld [vmem:[%s8 + $0xd0] sm:$0xff]
    %v1862 = vld [vmem:[%s8 + $0xd8] sm:$0xff]
    %v1863 = vld [vmem:[%s8 + $0xe0] sm:$0xff]
    %v1864 = vld [vmem:[%s8 + $0xe8] sm:$0xff]
    %v1865 = vld [vmem:[%s8 + $0xf0] sm:$0xff]
    %v1866 = vld [vmem:[%s8 + $0xf8] sm:$0xff]
    %v1867 = vld [vmem:[%s8 + $0x100] sm:$0xff]
    %v1868 = vld [vmem:[%s8 + $0x108] sm:$0xff]
    %v1869 = vld [vmem:[%s8 + $0x110] sm:$0xff]
    %v1870 = vld [vmem:[%s8 + $0x118] sm:$0xff]
    %v1871 = vld [vmem:[%s8 + $0x120] sm:$0xff]
    %v1872 = vld [vmem:[%s8 + $0x128] sm:$0xff]
    %v1873 = vld [vmem:[%s8 + $0x130] sm:$0xff]
    %v1874 = vld [vmem:[%s8 + $0x138] sm:$0xff]
    %v1875 = vld [vmem:[%s8 + $0x140] sm:$0xff]
    %v1876 = vld [vmem:[%s8 + $0x148] sm:$0xff]
    %v1877 = vld [vmem:[%s8 + $0x150] sm:$0xff]
    %v1878 = vld [vmem:[%s8 + $0x158] sm:$0xff]
    %v1879 = vld [vmem:[%s8 + $0x160] sm:$0xff]
    %v1880 = vld [vmem:[%s8 + $0x168] sm:$0xff]
    %v1881 = vld [vmem:[%s8 + $0x170] sm:$0xff]
    %v1882 = vld [vmem:[%s8 + $0x178] sm:$0xff]
    %v1883 = vld [vmem:[%s8 + $0x180] sm:$0xff]
    %v1884 = vld [vmem:[%s8 + $0x188] sm:$0xff]
    %v1885 = vld [vmem:[%s8 + $0x190] sm:$0xff]
    %v1886 = vld [vmem:[%s8 + $0x198] sm:$0xff]
    %v1887 = vld [vmem:[%s8 + $0x1a0] sm:$0xff]
    %v1888 = vld [vmem:[%s8 + $0x1a8] sm:$0xff]
    %v1889 = vld [vmem:[%s8 + $0x1b0] sm:$0xff]
    %v1890 = vld [vmem:[%s8 + $0x1b8] sm:$0xff]
    %v1891 = vld [vmem:[%s8 + $0x1c0] sm:$0xff]
    %v1892 = vld [vmem:[%s8 + $0x1c8] sm:$0xff]
    %v1893 = vld [vmem:[%s8 + $0x1d0] sm:$0xff]
    %v1894 = vld [vmem:[%s8 + $0x1d8] sm:$0xff]
    %v1895 = vld [vmem:[%s8 + $0x1e0] sm:$0xff]
    %v1896 = vld [vmem:[%s8 + $0x1e8] sm:$0xff]
    %v1897 = vld [vmem:[%s8 + $0x1f0] sm:$0xff]
    %v1898 = vld [vmem:[%s8 + $0x1f8] sm:$0xff]
    %v1899 = vld [vmem:[%s8 + $0x200] sm:$0xff]
    %v1900 = vld [vmem:[%s8 + $0x208] sm:$0xff]
    %v1901 = vld [vmem:[%s8 + $0x210] sm:$0xff]
    %v1902 = vld [vmem:[%s8 + $0x218] sm:$0xff]
    %v1903 = vld [vmem:[%s8 + $0x220] sm:$0xff]
    %v1904 = vld [vmem:[%s8 + $0x228] sm:$0xff]
    %v1905 = vld [vmem:[%s8 + $0x230] sm:$0xff]
    %v1906 = vld [vmem:[%s8 + $0x238] sm:$0xff]
    %v1907 = vld [vmem:[%s8 + $0x240] sm:$0xff]
    %v1908 = vld [vmem:[%s8 + $0x248] sm:$0xff]
    %v1909 = vld [vmem:[%s8 + $0x250] sm:$0xff]
    %v1910 = vld [vmem:[%s8 + $0x258] sm:$0xff]
    %v1911 = vld [vmem:[%s8 + $0x260] sm:$0xff]
    %v1912 = vld [vmem:[%s8 + $0x268] sm:$0xff]
    %v1913 = vld [vmem:[%s8 + $0x270] sm:$0xff]
    %v1914 = vld [vmem:[%s8 + $0x278] sm:$0xff]
    %v1915 = vld [vmem:[%s8 + $0x280] sm:$0xff]
    %v1916 = vld [vmem:[%s8 + $0x288] sm:$0xff]
    %v1917 = vld [vmem:[%s8 + $0x290] sm:$0xff]
    %v1918 = vld [vmem:[%s8 + $0x298] sm:$0xff]
    %v1919 = vld [vmem:[%s8 + $0x2a0] sm:$0xff]
    %v1920 = vld [vmem:[%s8 + $0x2a8] sm:$0xff]
    %v1921 = vld [vmem:[%s8 + $0x2b0] sm:$0xff]
    %v1922 = vld [vmem:[%s8 + $0x2b8] sm:$0xff]
    %v1923 = vld [vmem:[%s8 + $0x2c0] sm:$0xff]
    %v1924 = vld [vmem:[%s8 + $0x2c8] sm:$0xff]
    %v1925 = vld [vmem:[%s8 + $0x2d0] sm:$0xff]
    %v1926 = vld [vmem:[%s8 + $0x2d8] sm:$0xff]
    %v1927 = vld [vmem:[%s8 + $0x2e0] sm:$0xff]
    %v1928 = vld [vmem:[%s8 + $0x2e8] sm:$0xff]
    %v1929 = vld [vmem:[%s8 + $0x2f0] sm:$0xff]
    %v1930 = vld [vmem:[%s8 + $0x2f8] sm:$0xff]
    %v1931 = vld [vmem:[%s8 + $0x300] sm:$0xff]
    %v1932 = vld [vmem:[%s8 + $0x308] sm:$0xff]
    %v1933 = vld [vmem:[%s8 + $0x310] sm:$0xff]
    %v1934 = vld [vmem:[%s8 + $0x318] sm:$0xff]
    %v1935 = vld [vmem:[%s8 + $0x320] sm:$0xff]
    %v1936 = vld [vmem:[%s8 + $0x328] sm:$0xff]
    %v1937 = vld [vmem:[%s8 + $0x330] sm:$0xff]
    %v1938 = vld [vmem:[%s8 + $0x338] sm:$0xff]
    %v1939 = vld [vmem:[%s8 + $0x340] sm:$0xff]
    %v1940 = vld [vmem:[%s8 + $0x348] sm:$0xff]
    %v1941 = vld [vmem:[%s8 + $0x350] sm:$0xff]
    %v1942 = vld [vmem:[%s8 + $0x358] sm:$0xff]
    %v1943 = vld [vmem:[%s8 + $0x360] sm:$0xff]
    %v1944 = vld [vmem:[%s8 + $0x368] sm:$0xff]
    %v1945 = vld [vmem:[%s8 + $0x370] sm:$0xff]
    %v1946 = vld [vmem:[%s8 + $0x378] sm:$0xff]
    %v1947 = vld [vmem:[%s8 + $0x380] sm:$0xff]
    %v1948 = vld [vmem:[%s8 + $0x388] sm:$0xff]
    %v1949 = vld [vmem:[%s8 + $0x390] sm:$0xff]
    %v1950 = vld [vmem:[%s8 + $0x398] sm:$0xff]
    %v1951 = vld [vmem:[%s8 + $0x3a0] sm:$0xff]
    %v1952 = vld [vmem:[%s8 + $0x3a8] sm:$0xff]
    %v1953 = vld [vmem:[%s8 + $0x3b0] sm:$0xff]
    %v1954 = vld [vmem:[%s8 + $0x3b8] sm:$0xff]
    %v1955 = vld [vmem:[%s8 + $0x3c0] sm:$0xff]
    %v1956 = vld [vmem:[%s8 + $0x3c8] sm:$0xff]
    %v1957 = vld [vmem:[%s8 + $0x3d0] sm:$0xff]
    %v1958 = vld [vmem:[%s8 + $0x3d8] sm:$0xff]
    %v1959 = vld [vmem:[%s8 + $0x3e0] sm:$0xff]
    %v1960 = vld [vmem:[%s8 + $0x3e8] sm:$0xff]
    %v1961 = vld [vmem:[%s8 + $0x3f0] sm:$0xff]
    %v1962 = vld [vmem:[%s8 + $0x3f8] sm:$0xff]
    %v1963 = vld [vmem:[%s9] sm:$0xf]
    %v1965 = vlaneseq
    %v1966 = vshrl.u32 %v1965, 7
    %v1967 = vsub.s32 0, %v1966
    %v1968 = vrot.slane %v1963, %v1967
    %v1969 = vlaneseq
    %v1970 = vshrl.u32 %v1969, 7
    %v1971 = vsub.s32 1, %v1970
    %v1972 = vrot.slane %v1963, %v1971
    %v1973 = vlaneseq
    %v1974 = vshrl.u32 %v1973, 7
    %v1975 = vsub.s32 2, %v1974
    %v1976 = vrot.slane %v1963, %v1975
    %v1977 = vlaneseq
    %v1978 = vshrl.u32 %v1977, 7
    %v1979 = vsub.s32 3, %v1978
    %v1980 = vrot.slane %v1963, %v1979
    %v2113 = vunpack.c.l.b16 %v1835
    %v2114 = vunpack.c.h.b16 %v1835
    %v2115 = vunpack.c.l.b16 %v1836
    %v2116 = vunpack.c.h.b16 %v1836
    %v2117 = vunpack.c.l.b16 %v1837
    %v2118 = vunpack.c.h.b16 %v1837
    %v2119 = vunpack.c.l.b16 %v1838
    %v2120 = vunpack.c.h.b16 %v1838
    %v2121 = vunpack.c.l.b16 %v1839
    %v2122 = vunpack.c.h.b16 %v1839
    %v2123 = vunpack.c.l.b16 %v1840
    %v2124 = vunpack.c.h.b16 %v1840
    %v2125 = vunpack.c.l.b16 %v1841
    %v2126 = vunpack.c.h.b16 %v1841
    %v2127 = vunpack.c.l.b16 %v1842
    %v2128 = vunpack.c.h.b16 %v1842
    %v2129 = vunpack.c.l.b16 %v1843
    %v2130 = vunpack.c.h.b16 %v1843
    %v2131 = vunpack.c.l.b16 %v1844
    %v2132 = vunpack.c.h.b16 %v1844
    %v2133 = vunpack.c.l.b16 %v1845
    %v2134 = vunpack.c.h.b16 %v1845
    %v2135 = vunpack.c.l.b16 %v1846
    %v2136 = vunpack.c.h.b16 %v1846
    %v2137 = vunpack.c.l.b16 %v1847
    %v2138 = vunpack.c.h.b16 %v1847
    %v2139 = vunpack.c.l.b16 %v1848
    %v2140 = vunpack.c.h.b16 %v1848
    %v2141 = vunpack.c.l.b16 %v1849
    %v2142 = vunpack.c.h.b16 %v1849
    %v2143 = vunpack.c.l.b16 %v1850
    %v2144 = vunpack.c.h.b16 %v1850
    %v2145 = vunpack.c.l.b16 %v1851
    %v2146 = vunpack.c.h.b16 %v1851
    %v2147 = vunpack.c.l.b16 %v1852
    %v2148 = vunpack.c.h.b16 %v1852
    %v2149 = vunpack.c.l.b16 %v1853
    %v2150 = vunpack.c.h.b16 %v1853
    %v2151 = vunpack.c.l.b16 %v1854
    %v2152 = vunpack.c.h.b16 %v1854
    %v2153 = vunpack.c.l.b16 %v1855
    %v2154 = vunpack.c.h.b16 %v1855
    %v2155 = vunpack.c.l.b16 %v1856
    %v2156 = vunpack.c.h.b16 %v1856
    %v2157 = vunpack.c.l.b16 %v1857
    %v2158 = vunpack.c.h.b16 %v1857
    %v2159 = vunpack.c.l.b16 %v1858
    %v2160 = vunpack.c.h.b16 %v1858
    %v2161 = vunpack.c.l.b16 %v1859
    %v2162 = vunpack.c.h.b16 %v1859
    %v2163 = vunpack.c.l.b16 %v1860
    %v2164 = vunpack.c.h.b16 %v1860
    %v2165 = vunpack.c.l.b16 %v1861
    %v2166 = vunpack.c.h.b16 %v1861
    %v2167 = vunpack.c.l.b16 %v1862
    %v2168 = vunpack.c.h.b16 %v1862
    %v2169 = vunpack.c.l.b16 %v1863
    %v2170 = vunpack.c.h.b16 %v1863
    %v2171 = vunpack.c.l.b16 %v1864
    %v2172 = vunpack.c.h.b16 %v1864
    %v2173 = vunpack.c.l.b16 %v1865
    %v2174 = vunpack.c.h.b16 %v1865
    %v2175 = vunpack.c.l.b16 %v1866
    %v2176 = vunpack.c.h.b16 %v1866
    %v2177 = vunpack.c.l.b16 %v1867
    %v2178 = vunpack.c.h.b16 %v1867
    %v2179 = vunpack.c.l.b16 %v1868
    %v2180 = vunpack.c.h.b16 %v1868
    %v2181 = vunpack.c.l.b16 %v1869
    %v2182 = vunpack.c.h.b16 %v1869
    %v2183 = vunpack.c.l.b16 %v1870
    %v2184 = vunpack.c.h.b16 %v1870
    %v2185 = vunpack.c.l.b16 %v1871
    %v2186 = vunpack.c.h.b16 %v1871
    %v2187 = vunpack.c.l.b16 %v1872
    %v2188 = vunpack.c.h.b16 %v1872
    %v2189 = vunpack.c.l.b16 %v1873
    %v2190 = vunpack.c.h.b16 %v1873
    %v2191 = vunpack.c.l.b16 %v1874
    %v2192 = vunpack.c.h.b16 %v1874
    %v2193 = vunpack.c.l.b16 %v1875
    %v2194 = vunpack.c.h.b16 %v1875
    %v2195 = vunpack.c.l.b16 %v1876
    %v2196 = vunpack.c.h.b16 %v1876
    %v2197 = vunpack.c.l.b16 %v1877
    %v2198 = vunpack.c.h.b16 %v1877
    %v2199 = vunpack.c.l.b16 %v1878
    %v2200 = vunpack.c.h.b16 %v1878
    %v2201 = vunpack.c.l.b16 %v1879
    %v2202 = vunpack.c.h.b16 %v1879
    %v2203 = vunpack.c.l.b16 %v1880
    %v2204 = vunpack.c.h.b16 %v1880
    %v2205 = vunpack.c.l.b16 %v1881
    %v2206 = vunpack.c.h.b16 %v1881
    %v2207 = vunpack.c.l.b16 %v1882
    %v2208 = vunpack.c.h.b16 %v1882
    %v2209 = vunpack.c.l.b16 %v1883
    %v2210 = vunpack.c.h.b16 %v1883
    %v2211 = vunpack.c.l.b16 %v1884
    %v2212 = vunpack.c.h.b16 %v1884
    %v2213 = vunpack.c.l.b16 %v1885
    %v2214 = vunpack.c.h.b16 %v1885
    %v2215 = vunpack.c.l.b16 %v1886
    %v2216 = vunpack.c.h.b16 %v1886
    %v2217 = vunpack.c.l.b16 %v1887
    %v2218 = vunpack.c.h.b16 %v1887
    %v2219 = vunpack.c.l.b16 %v1888
    %v2220 = vunpack.c.h.b16 %v1888
    %v2221 = vunpack.c.l.b16 %v1889
    %v2222 = vunpack.c.h.b16 %v1889
    %v2223 = vunpack.c.l.b16 %v1890
    %v2224 = vunpack.c.h.b16 %v1890
    %v2225 = vunpack.c.l.b16 %v1891
    %v2226 = vunpack.c.h.b16 %v1891
    %v2227 = vunpack.c.l.b16 %v1892
    %v2228 = vunpack.c.h.b16 %v1892
    %v2229 = vunpack.c.l.b16 %v1893
    %v2230 = vunpack.c.h.b16 %v1893
    %v2231 = vunpack.c.l.b16 %v1894
    %v2232 = vunpack.c.h.b16 %v1894
    %v2233 = vunpack.c.l.b16 %v1895
    %v2234 = vunpack.c.h.b16 %v1895
    %v2235 = vunpack.c.l.b16 %v1896
    %v2236 = vunpack.c.h.b16 %v1896
    %v2237 = vunpack.c.l.b16 %v1897
    %v2238 = vunpack.c.h.b16 %v1897
    %v2239 = vunpack.c.l.b16 %v1898
    %v2240 = vunpack.c.h.b16 %v1898
    %v2241 = vunpack.c.l.b16 %v1899
    %v2242 = vunpack.c.h.b16 %v1899
    %v2243 = vunpack.c.l.b16 %v1900
    %v2244 = vunpack.c.h.b16 %v1900
    %v2245 = vunpack.c.l.b16 %v1901
    %v2246 = vunpack.c.h.b16 %v1901
    %v2247 = vunpack.c.l.b16 %v1902
    %v2248 = vunpack.c.h.b16 %v1902
    %v2249 = vunpack.c.l.b16 %v1903
    %v2250 = vunpack.c.h.b16 %v1903
    %v2251 = vunpack.c.l.b16 %v1904
    %v2252 = vunpack.c.h.b16 %v1904
    %v2253 = vunpack.c.l.b16 %v1905
    %v2254 = vunpack.c.h.b16 %v1905
    %v2255 = vunpack.c.l.b16 %v1906
    %v2256 = vunpack.c.h.b16 %v1906
    %v2257 = vunpack.c.l.b16 %v1907
    %v2258 = vunpack.c.h.b16 %v1907
    %v2259 = vunpack.c.l.b16 %v1908
    %v2260 = vunpack.c.h.b16 %v1908
    %v2261 = vunpack.c.l.b16 %v1909
    %v2262 = vunpack.c.h.b16 %v1909
    %v2263 = vunpack.c.l.b16 %v1910
    %v2264 = vunpack.c.h.b16 %v1910
    %v2265 = vunpack.c.l.b16 %v1911
    %v2266 = vunpack.c.h.b16 %v1911
    %v2267 = vunpack.c.l.b16 %v1912
    %v2268 = vunpack.c.h.b16 %v1912
    %v2269 = vunpack.c.l.b16 %v1913
    %v2270 = vunpack.c.h.b16 %v1913
    %v2271 = vunpack.c.l.b16 %v1914
    %v2272 = vunpack.c.h.b16 %v1914
    %v2273 = vunpack.c.l.b16 %v1915
    %v2274 = vunpack.c.h.b16 %v1915
    %v2275 = vunpack.c.l.b16 %v1916
    %v2276 = vunpack.c.h.b16 %v1916
    %v2277 = vunpack.c.l.b16 %v1917
    %v2278 = vunpack.c.h.b16 %v1917
    %v2279 = vunpack.c.l.b16 %v1918
    %v2280 = vunpack.c.h.b16 %v1918
    %v2281 = vunpack.c.l.b16 %v1919
    %v2282 = vunpack.c.h.b16 %v1919
    %v2283 = vunpack.c.l.b16 %v1920
    %v2284 = vunpack.c.h.b16 %v1920
    %v2285 = vunpack.c.l.b16 %v1921
    %v2286 = vunpack.c.h.b16 %v1921
    %v2287 = vunpack.c.l.b16 %v1922
    %v2288 = vunpack.c.h.b16 %v1922
    %v2289 = vunpack.c.l.b16 %v1923
    %v2290 = vunpack.c.h.b16 %v1923
    %v2291 = vunpack.c.l.b16 %v1924
    %v2292 = vunpack.c.h.b16 %v1924
    %v2293 = vunpack.c.l.b16 %v1925
    %v2294 = vunpack.c.h.b16 %v1925
    %v2295 = vunpack.c.l.b16 %v1926
    %v2296 = vunpack.c.h.b16 %v1926
    %v2297 = vunpack.c.l.b16 %v1927
    %v2298 = vunpack.c.h.b16 %v1927
    %v2299 = vunpack.c.l.b16 %v1928
    %v2300 = vunpack.c.h.b16 %v1928
    %v2301 = vunpack.c.l.b16 %v1929
    %v2302 = vunpack.c.h.b16 %v1929
    %v2303 = vunpack.c.l.b16 %v1930
    %v2304 = vunpack.c.h.b16 %v1930
    %v2305 = vunpack.c.l.b16 %v1931
    %v2306 = vunpack.c.h.b16 %v1931
    %v2307 = vunpack.c.l.b16 %v1932
    %v2308 = vunpack.c.h.b16 %v1932
    %v2309 = vunpack.c.l.b16 %v1933
    %v2310 = vunpack.c.h.b16 %v1933
    %v2311 = vunpack.c.l.b16 %v1934
    %v2312 = vunpack.c.h.b16 %v1934
    %v2313 = vunpack.c.l.b16 %v1935
    %v2314 = vunpack.c.h.b16 %v1935
    %v2315 = vunpack.c.l.b16 %v1936
    %v2316 = vunpack.c.h.b16 %v1936
    %v2317 = vunpack.c.l.b16 %v1937
    %v2318 = vunpack.c.h.b16 %v1937
    %v2319 = vunpack.c.l.b16 %v1938
    %v2320 = vunpack.c.h.b16 %v1938
    %v2321 = vunpack.c.l.b16 %v1939
    %v2322 = vunpack.c.h.b16 %v1939
    %v2323 = vunpack.c.l.b16 %v1940
    %v2324 = vunpack.c.h.b16 %v1940
    %v2325 = vunpack.c.l.b16 %v1941
    %v2326 = vunpack.c.h.b16 %v1941
    %v2327 = vunpack.c.l.b16 %v1942
    %v2328 = vunpack.c.h.b16 %v1942
    %v2329 = vunpack.c.l.b16 %v1943
    %v2330 = vunpack.c.h.b16 %v1943
    %v2331 = vunpack.c.l.b16 %v1944
    %v2332 = vunpack.c.h.b16 %v1944
    %v2333 = vunpack.c.l.b16 %v1945
    %v2334 = vunpack.c.h.b16 %v1945
    %v2335 = vunpack.c.l.b16 %v1946
    %v2336 = vunpack.c.h.b16 %v1946
    %v2337 = vunpack.c.l.b16 %v1947
    %v2338 = vunpack.c.h.b16 %v1947
    %v2339 = vunpack.c.l.b16 %v1948
    %v2340 = vunpack.c.h.b16 %v1948
    %v2341 = vunpack.c.l.b16 %v1949
    %v2342 = vunpack.c.h.b16 %v1949
    %v2343 = vunpack.c.l.b16 %v1950
    %v2344 = vunpack.c.h.b16 %v1950
    %v2345 = vunpack.c.l.b16 %v1951
    %v2346 = vunpack.c.h.b16 %v1951
    %v2347 = vunpack.c.l.b16 %v1952
    %v2348 = vunpack.c.h.b16 %v1952
    %v2349 = vunpack.c.l.b16 %v1953
    %v2350 = vunpack.c.h.b16 %v1953
    %v2351 = vunpack.c.l.b16 %v1954
    %v2352 = vunpack.c.h.b16 %v1954
    %v2353 = vunpack.c.l.b16 %v1955
    %v2354 = vunpack.c.h.b16 %v1955
    %v2355 = vunpack.c.l.b16 %v1956
    %v2356 = vunpack.c.h.b16 %v1956
    %v2357 = vunpack.c.l.b16 %v1957
    %v2358 = vunpack.c.h.b16 %v1957
    %v2359 = vunpack.c.l.b16 %v1958
    %v2360 = vunpack.c.h.b16 %v1958
    %v2361 = vunpack.c.l.b16 %v1959
    %v2362 = vunpack.c.h.b16 %v1959
    %v2363 = vunpack.c.l.b16 %v1960
    %v2364 = vunpack.c.h.b16 %v1960
    %v2365 = vunpack.c.l.b16 %v1961
    %v2366 = vunpack.c.h.b16 %v1961
    %v2367 = vunpack.c.l.b16 %v1962
    %v2368 = vunpack.c.h.b16 %v1962
    %v2369 = vpack.c.b16 %v2117, %v2113
    %v2370 = vpack.c.b16 %v2118, %v2114
    %v2371 = vpack.c.b16 %v2119, %v2115
    %v2372 = vpack.c.b16 %v2120, %v2116
    %v2373 = vpack.c.b16 %v2125, %v2121
    %v2374 = vpack.c.b16 %v2126, %v2122
    %v2375 = vpack.c.b16 %v2127, %v2123
    %v2376 = vpack.c.b16 %v2128, %v2124
    %v2377 = vpack.c.b16 %v2133, %v2129
    %v2378 = vpack.c.b16 %v2134, %v2130
    %v2379 = vpack.c.b16 %v2135, %v2131
    %v2380 = vpack.c.b16 %v2136, %v2132
    %v2381 = vpack.c.b16 %v2141, %v2137
    %v2382 = vpack.c.b16 %v2142, %v2138
    %v2383 = vpack.c.b16 %v2143, %v2139
    %v2384 = vpack.c.b16 %v2144, %v2140
    %v2385 = vpack.c.b16 %v2149, %v2145
    %v2386 = vpack.c.b16 %v2150, %v2146
    %v2387 = vpack.c.b16 %v2151, %v2147
    %v2388 = vpack.c.b16 %v2152, %v2148
    %v2389 = vpack.c.b16 %v2157, %v2153
    %v2390 = vpack.c.b16 %v2158, %v2154
    %v2391 = vpack.c.b16 %v2159, %v2155
    %v2392 = vpack.c.b16 %v2160, %v2156
    %v2393 = vpack.c.b16 %v2165, %v2161
    %v2394 = vpack.c.b16 %v2166, %v2162
    %v2395 = vpack.c.b16 %v2167, %v2163
    %v2396 = vpack.c.b16 %v2168, %v2164
    %v2397 = vpack.c.b16 %v2173, %v2169
    %v2398 = vpack.c.b16 %v2174, %v2170
    %v2399 = vpack.c.b16 %v2175, %v2171
    %v2400 = vpack.c.b16 %v2176, %v2172
    %v2401 = vpack.c.b16 %v2181, %v2177
    %v2402 = vpack.c.b16 %v2182, %v2178
    %v2403 = vpack.c.b16 %v2183, %v2179
    %v2404 = vpack.c.b16 %v2184, %v2180
    %v2405 = vpack.c.b16 %v2189, %v2185
    %v2406 = vpack.c.b16 %v2190, %v2186
    %v2407 = vpack.c.b16 %v2191, %v2187
    %v2408 = vpack.c.b16 %v2192, %v2188
    %v2409 = vpack.c.b16 %v2197, %v2193
    %v2410 = vpack.c.b16 %v2198, %v2194
    %v2411 = vpack.c.b16 %v2199, %v2195
    %v2412 = vpack.c.b16 %v2200, %v2196
    %v2413 = vpack.c.b16 %v2205, %v2201
    %v2414 = vpack.c.b16 %v2206, %v2202
    %v2415 = vpack.c.b16 %v2207, %v2203
    %v2416 = vpack.c.b16 %v2208, %v2204
    %v2417 = vpack.c.b16 %v2213, %v2209
    %v2418 = vpack.c.b16 %v2214, %v2210
    %v2419 = vpack.c.b16 %v2215, %v2211
    %v2420 = vpack.c.b16 %v2216, %v2212
    %v2421 = vpack.c.b16 %v2221, %v2217
    %v2422 = vpack.c.b16 %v2222, %v2218
    %v2423 = vpack.c.b16 %v2223, %v2219
    %v2424 = vpack.c.b16 %v2224, %v2220
    %v2425 = vpack.c.b16 %v2229, %v2225
    %v2426 = vpack.c.b16 %v2230, %v2226
    %v2427 = vpack.c.b16 %v2231, %v2227
    %v2428 = vpack.c.b16 %v2232, %v2228
    %v2429 = vpack.c.b16 %v2237, %v2233
    %v2430 = vpack.c.b16 %v2238, %v2234
    %v2431 = vpack.c.b16 %v2239, %v2235
    %v2432 = vpack.c.b16 %v2240, %v2236
    %v2433 = vpack.c.b16 %v2245, %v2241
    %v2434 = vpack.c.b16 %v2246, %v2242
    %v2435 = vpack.c.b16 %v2247, %v2243
    %v2436 = vpack.c.b16 %v2248, %v2244
    %v2437 = vpack.c.b16 %v2253, %v2249
    %v2438 = vpack.c.b16 %v2254, %v2250
    %v2439 = vpack.c.b16 %v2255, %v2251
    %v2440 = vpack.c.b16 %v2256, %v2252
    %v2441 = vpack.c.b16 %v2261, %v2257
    %v2442 = vpack.c.b16 %v2262, %v2258
    %v2443 = vpack.c.b16 %v2263, %v2259
    %v2444 = vpack.c.b16 %v2264, %v2260
    %v2445 = vpack.c.b16 %v2269, %v2265
    %v2446 = vpack.c.b16 %v2270, %v2266
    %v2447 = vpack.c.b16 %v2271, %v2267
    %v2448 = vpack.c.b16 %v2272, %v2268
    %v2449 = vpack.c.b16 %v2277, %v2273
    %v2450 = vpack.c.b16 %v2278, %v2274
    %v2451 = vpack.c.b16 %v2279, %v2275
    %v2452 = vpack.c.b16 %v2280, %v2276
    %v2453 = vpack.c.b16 %v2285, %v2281
    %v2454 = vpack.c.b16 %v2286, %v2282
    %v2455 = vpack.c.b16 %v2287, %v2283
    %v2456 = vpack.c.b16 %v2288, %v2284
    %v2457 = vpack.c.b16 %v2293, %v2289
    %v2458 = vpack.c.b16 %v2294, %v2290
    %v2459 = vpack.c.b16 %v2295, %v2291
    %v2460 = vpack.c.b16 %v2296, %v2292
    %v2461 = vpack.c.b16 %v2301, %v2297
    %v2462 = vpack.c.b16 %v2302, %v2298
    %v2463 = vpack.c.b16 %v2303, %v2299
    %v2464 = vpack.c.b16 %v2304, %v2300
    %v2465 = vpack.c.b16 %v2309, %v2305
    %v2466 = vpack.c.b16 %v2310, %v2306
    %v2467 = vpack.c.b16 %v2311, %v2307
    %v2468 = vpack.c.b16 %v2312, %v2308
    %v2469 = vpack.c.b16 %v2317, %v2313
    %v2470 = vpack.c.b16 %v2318, %v2314
    %v2471 = vpack.c.b16 %v2319, %v2315
    %v2472 = vpack.c.b16 %v2320, %v2316
    %v2473 = vpack.c.b16 %v2325, %v2321
    %v2474 = vpack.c.b16 %v2326, %v2322
    %v2475 = vpack.c.b16 %v2327, %v2323
    %v2476 = vpack.c.b16 %v2328, %v2324
    %v2477 = vpack.c.b16 %v2333, %v2329
    %v2478 = vpack.c.b16 %v2334, %v2330
    %v2479 = vpack.c.b16 %v2335, %v2331
    %v2480 = vpack.c.b16 %v2336, %v2332
    %v2481 = vpack.c.b16 %v2341, %v2337
    %v2482 = vpack.c.b16 %v2342, %v2338
    %v2483 = vpack.c.b16 %v2343, %v2339
    %v2484 = vpack.c.b16 %v2344, %v2340
    %v2485 = vpack.c.b16 %v2349, %v2345
    %v2486 = vpack.c.b16 %v2350, %v2346
    %v2487 = vpack.c.b16 %v2351, %v2347
    %v2488 = vpack.c.b16 %v2352, %v2348
    %v2489 = vpack.c.b16 %v2357, %v2353
    %v2490 = vpack.c.b16 %v2358, %v2354
    %v2491 = vpack.c.b16 %v2359, %v2355
    %v2492 = vpack.c.b16 %v2360, %v2356
    %v2493 = vpack.c.b16 %v2365, %v2361
    %v2494 = vpack.c.b16 %v2366, %v2362
    %v2495 = vpack.c.b16 %v2367, %v2363
    %v2496 = vpack.c.b16 %v2368, %v2364
    %2625 = vmatprep.subr.bf16.mxu0 %v2398
    %2626 = vmatpush1.bf16.msra.mxu0 %v2397
    %2627 = vmatprep.subr.bf16.mxu0 %v2394
    %2628 = vmatpush1.bf16.msra.mxu0 %v2393
    %2629 = vmatprep.subr.bf16.mxu0 %v2390
    %2630 = vmatpush1.bf16.msra.mxu0 %v2389
    %2631 = vmatprep.subr.bf16.mxu0 %v2386
    %2632 = vmatpush1.bf16.msra.mxu0 %v2385
    %2633 = vmatprep.subr.bf16.mxu0 %v2382
    %2634 = vmatpush1.bf16.msra.mxu0 %v2381
    %2635 = vmatprep.subr.bf16.mxu0 %v2378
    %2636 = vmatpush1.bf16.msra.mxu0 %v2377
    %2637 = vmatprep.subr.bf16.mxu0 %v2374
    %2638 = vmatpush1.bf16.msra.mxu0 %v2373
    %2639 = vmatprep.subr.bf16.mxu0 %v2370
    %2640 = vmatpush1.bf16.msra.mxu0 %v2369
    %2641 = vmatprep.subr.bf16.mxu0 %v2430
    %2642 = vmatpush2.bf16.msra.mxu0 %v2429
    %2643 = vmatprep.subr.bf16.mxu0 %v2426
    %2644 = vmatpush2.bf16.msra.mxu0 %v2425
    %2645 = vmatprep.subr.bf16.mxu0 %v2422
    %2646 = vmatpush2.bf16.msra.mxu0 %v2421
    %2647 = vmatprep.subr.bf16.mxu0 %v2418
    %2648 = vmatpush2.bf16.msra.mxu0 %v2417
    %2649 = vmatprep.subr.bf16.mxu0 %v2414
    %2650 = vmatpush2.bf16.msra.mxu0 %v2413
    %2651 = vmatprep.subr.bf16.mxu0 %v2410
    %2652 = vmatpush2.bf16.msra.mxu0 %v2409
    %2653 = vmatprep.subr.bf16.mxu0 %v2406
    %2654 = vmatpush2.bf16.msra.mxu0 %v2405
    %2655 = vmatprep.subr.bf16.mxu0 %v2402
    %2656 = vmatpush2.bf16.msra.mxu0 %v2401
    %2657 = vmatprep.mubr.bf16.mxu0 %v1828
    %2658 = vmatmul.mubr.bf16.gmra.mxu0 %v1827
    %v2659 = vpop.f32.mrf.mxu0
    %v2660 = vadd.f32 %v1968, %v2659
    %v2661 = vpop.f32.mrf.mxu0
    %v2662 = vadd.f32 %v1972, %v2661
    %v2663 = vpop.f32.mrf.mxu0
    %v2664 = vadd.f32 %v1968, %v2663
    %v2665 = vpop.f32.mrf.mxu0
    %v2666 = vadd.f32 %v1972, %v2665
    %2667 = vmatprep.mubr.bf16.mxu0 %v1832
    %2668 = vmatmul.mubr.bf16.gmra.mxu0 %v1831
    %v2669 = vpop.f32.mrf.mxu0
    %v2670 = vadd.f32 %v1968, %v2669
    %v2671 = vpop.f32.mrf.mxu0
    %v2672 = vadd.f32 %v1972, %v2671
    %v2673 = vpop.f32.mrf.mxu0
    %v2674 = vadd.f32 %v1968, %v2673
    %v2675 = vpop.f32.mrf.mxu0
    %v2676 = vadd.f32 %v1972, %v2675
    %2677 = vdwg.mxu0
    %2678 = vmatprep.subr.bf16.mxu0 %v2462
    %2679 = vmatpush1.bf16.msra.mxu0 %v2461
    %2680 = vmatprep.subr.bf16.mxu0 %v2458
    %2681 = vmatpush1.bf16.msra.mxu0 %v2457
    %2682 = vmatprep.subr.bf16.mxu0 %v2454
    %2683 = vmatpush1.bf16.msra.mxu0 %v2453
    %2684 = vmatprep.subr.bf16.mxu0 %v2450
    %2685 = vmatpush1.bf16.msra.mxu0 %v2449
    %2686 = vmatprep.subr.bf16.mxu0 %v2446
    %2687 = vmatpush1.bf16.msra.mxu0 %v2445
    %2688 = vmatprep.subr.bf16.mxu0 %v2442
    %2689 = vmatpush1.bf16.msra.mxu0 %v2441
    %2690 = vmatprep.subr.bf16.mxu0 %v2438
    %2691 = vmatpush1.bf16.msra.mxu0 %v2437
    %2692 = vmatprep.subr.bf16.mxu0 %v2434
    %2693 = vmatpush1.bf16.msra.mxu0 %v2433
    %2694 = vmatprep.subr.bf16.mxu0 %v2494
    %2695 = vmatpush2.bf16.msra.mxu0 %v2493
    %2696 = vmatprep.subr.bf16.mxu0 %v2490
    %2697 = vmatpush2.bf16.msra.mxu0 %v2489
    %2698 = vmatprep.subr.bf16.mxu0 %v2486
    %2699 = vmatpush2.bf16.msra.mxu0 %v2485
    %2700 = vmatprep.subr.bf16.mxu0 %v2482
    %2701 = vmatpush2.bf16.msra.mxu0 %v2481
    %2702 = vmatprep.subr.bf16.mxu0 %v2478
    %2703 = vmatpush2.bf16.msra.mxu0 %v2477
    %2704 = vmatprep.subr.bf16.mxu0 %v2474
    %2705 = vmatpush2.bf16.msra.mxu0 %v2473
    %2706 = vmatprep.subr.bf16.mxu0 %v2470
    %2707 = vmatpush2.bf16.msra.mxu0 %v2469
    %2708 = vmatprep.subr.bf16.mxu0 %v2466
    %2709 = vmatpush2.bf16.msra.mxu0 %v2465
    %2710 = vmatprep.mubr.bf16.mxu0 %v1830
    %2711 = vmatmul.mubr.bf16.gmra.mxu0 %v1829
    %v2712 = vpop.f32.mrf.mxu0
    %v2713 = vadd.f32 %v2660, %v2712
    %v2714 = vpop.f32.mrf.mxu0
    %v2715 = vadd.f32 %v2662, %v2714
    %v2716 = vpop.f32.mrf.mxu0
    %v2717 = vadd.f32 %v2664, %v2716
    %v2718 = vpop.f32.mrf.mxu0
    %v2719 = vadd.f32 %v2666, %v2718
    %2720 = vmatprep.mubr.bf16.mxu0 %v1834
    %2721 = vmatmul.mubr.bf16.gmra.mxu0 %v1833
    %v2722 = vpop.f32.mrf.mxu0
    %v2723 = vadd.f32 %v2670, %v2722
    %v2724 = vpop.f32.mrf.mxu0
    %v2725 = vadd.f32 %v2672, %v2724
    %v2726 = vpop.f32.mrf.mxu0
    %v2727 = vadd.f32 %v2674, %v2726
    %v2728 = vpop.f32.mrf.mxu0
    %v2729 = vadd.f32 %v2676, %v2728
    %2730 = vdwg.mxu0
    %2731 = vmatprep.subr.bf16.mxu0 %v2400
    %2732 = vmatpush1.bf16.msra.mxu0 %v2399
    %2733 = vmatprep.subr.bf16.mxu0 %v2396
    %2734 = vmatpush1.bf16.msra.mxu0 %v2395
    %2735 = vmatprep.subr.bf16.mxu0 %v2392
    %2736 = vmatpush1.bf16.msra.mxu0 %v2391
    %2737 = vmatprep.subr.bf16.mxu0 %v2388
    %2738 = vmatpush1.bf16.msra.mxu0 %v2387
    %2739 = vmatprep.subr.bf16.mxu0 %v2384
    %2740 = vmatpush1.bf16.msra.mxu0 %v2383
    %2741 = vmatprep.subr.bf16.mxu0 %v2380
    %2742 = vmatpush1.bf16.msra.mxu0 %v2379
    %2743 = vmatprep.subr.bf16.mxu0 %v2376
    %2744 = vmatpush1.bf16.msra.mxu0 %v2375
    %2745 = vmatprep.subr.bf16.mxu0 %v2372
    %2746 = vmatpush1.bf16.msra.mxu0 %v2371
    %2747 = vmatprep.subr.bf16.mxu0 %v2432
    %2748 = vmatpush2.bf16.msra.mxu0 %v2431
    %2749 = vmatprep.subr.bf16.mxu0 %v2428
    %2750 = vmatpush2.bf16.msra.mxu0 %v2427
    %2751 = vmatprep.subr.bf16.mxu0 %v2424
    %2752 = vmatpush2.bf16.msra.mxu0 %v2423
    %2753 = vmatprep.subr.bf16.mxu0 %v2420
    %2754 = vmatpush2.bf16.msra.mxu0 %v2419
    %2755 = vmatprep.subr.bf16.mxu0 %v2416
    %2756 = vmatpush2.bf16.msra.mxu0 %v2415
    %2757 = vmatprep.subr.bf16.mxu0 %v2412
    %2758 = vmatpush2.bf16.msra.mxu0 %v2411
    %2759 = vmatprep.subr.bf16.mxu0 %v2408
    %2760 = vmatpush2.bf16.msra.mxu0 %v2407
    %2761 = vmatprep.subr.bf16.mxu0 %v2404
    %2762 = vmatpush2.bf16.msra.mxu0 %v2403
    %2763 = vmatprep.mubr.bf16.mxu0 %v1828
    %2764 = vmatmul.mubr.bf16.gmra.mxu0 %v1827
    %v2765 = vpop.f32.mrf.mxu0
    %v2766 = vadd.f32 %v1976, %v2765
    %v2767 = vpop.f32.mrf.mxu0
    %v2768 = vadd.f32 %v1980, %v2767
    %v2769 = vpop.f32.mrf.mxu0
    %v2770 = vadd.f32 %v1976, %v2769
    %v2771 = vpop.f32.mrf.mxu0
    %v2772 = vadd.f32 %v1980, %v2771
    %2773 = vmatprep.mubr.bf16.mxu0 %v1832
    %2774 = vmatmul.mubr.bf16.gmra.mxu0 %v1831
    %v2775 = vpop.f32.mrf.mxu0
    %v2776 = vadd.f32 %v1976, %v2775
    %v2777 = vpop.f32.mrf.mxu0
    %v2778 = vadd.f32 %v1980, %v2777
    %v2779 = vpop.f32.mrf.mxu0
    %v2780 = vadd.f32 %v1976, %v2779
    %v2781 = vpop.f32.mrf.mxu0
    %v2782 = vadd.f32 %v1980, %v2781
    %2783 = vdwg.mxu0
    %2784 = vmatprep.subr.bf16.mxu0 %v2464
    %2785 = vmatpush1.bf16.msra.mxu0 %v2463
    %2786 = vmatprep.subr.bf16.mxu0 %v2460
    %2787 = vmatpush1.bf16.msra.mxu0 %v2459
    %2788 = vmatprep.subr.bf16.mxu0 %v2456
    %2789 = vmatpush1.bf16.msra.mxu0 %v2455
    %2790 = vmatprep.subr.bf16.mxu0 %v2452
    %2791 = vmatpush1.bf16.msra.mxu0 %v2451
    %2792 = vmatprep.subr.bf16.mxu0 %v2448
    %2793 = vmatpush1.bf16.msra.mxu0 %v2447
    %2794 = vmatprep.subr.bf16.mxu0 %v2444
    %2795 = vmatpush1.bf16.msra.mxu0 %v2443
    %2796 = vmatprep.subr.bf16.mxu0 %v2440
    %2797 = vmatpush1.bf16.msra.mxu0 %v2439
    %2798 = vmatprep.subr.bf16.mxu0 %v2436
    %2799 = vmatpush1.bf16.msra.mxu0 %v2435
    %2800 = vmatprep.subr.bf16.mxu0 %v2496
    %2801 = vmatpush2.bf16.msra.mxu0 %v2495
    %2802 = vmatprep.subr.bf16.mxu0 %v2492
    %2803 = vmatpush2.bf16.msra.mxu0 %v2491
    %2804 = vmatprep.subr.bf16.mxu0 %v2488
    %2805 = vmatpush2.bf16.msra.mxu0 %v2487
    %2806 = vmatprep.subr.bf16.mxu0 %v2484
    %2807 = vmatpush2.bf16.msra.mxu0 %v2483
    %2808 = vmatprep.subr.bf16.mxu0 %v2480
    %2809 = vmatpush2.bf16.msra.mxu0 %v2479
    %2810 = vmatprep.subr.bf16.mxu0 %v2476
    %2811 = vmatpush2.bf16.msra.mxu0 %v2475
    %2812 = vmatprep.subr.bf16.mxu0 %v2472
    %2813 = vmatpush2.bf16.msra.mxu0 %v2471
    %2814 = vmatprep.subr.bf16.mxu0 %v2468
    %2815 = vmatpush2.bf16.msra.mxu0 %v2467
    %2816 = vmatprep.mubr.bf16.mxu0 %v1830
    %2817 = vmatmul.mubr.bf16.gmra.mxu0 %v1829
    %v2818 = vpop.f32.mrf.mxu0
    %v2819 = vadd.f32 %v2766, %v2818
    %v2820 = vpop.f32.mrf.mxu0
    %v2821 = vadd.f32 %v2768, %v2820
    %v2822 = vpop.f32.mrf.mxu0
    %v2823 = vadd.f32 %v2770, %v2822
    %v2824 = vpop.f32.mrf.mxu0
    %v2825 = vadd.f32 %v2772, %v2824
    %2826 = vmatprep.mubr.bf16.mxu0 %v1834
    %2827 = vmatmul.mubr.bf16.gmra.mxu0 %v1833
    %v2828 = vpop.f32.mrf.mxu0
    %v2829 = vadd.f32 %v2776, %v2828
    %v2830 = vpop.f32.mrf.mxu0
    %v2831 = vadd.f32 %v2778, %v2830
    %v2832 = vpop.f32.mrf.mxu0
    %v2833 = vadd.f32 %v2780, %v2832
    %v2834 = vpop.f32.mrf.mxu0
    %v2835 = vadd.f32 %v2782, %v2834
    %2836 = vdwg.mxu0
    %v2837 = vpack.c.bf16 %v2717, %v2713
    %v2838 = vpack.c.bf16 %v2719, %v2715
    %v2839 = vpack.c.bf16 %v2823, %v2819
    %v2840 = vpack.c.bf16 %v2825, %v2821
    %v2841 = vpack.c.bf16 %v2727, %v2723
    %v2842 = vpack.c.bf16 %v2729, %v2725
    %v2843 = vpack.c.bf16 %v2833, %v2829
    %v2844 = vpack.c.bf16 %v2835, %v2831
    %v2853 = vunpack.c.l.b16 %v1435
    %v2854 = vunpack.c.l.b16 %v1436
    %v2855 = vunpack.c.l.b16 %v1437
    %v2856 = vunpack.c.l.b16 %v1438
    %v2857 = vunpack.c.h.b16 %v1435
    %v2858 = vunpack.c.h.b16 %v1436
    %v2859 = vunpack.c.h.b16 %v1437
    %v2860 = vunpack.c.h.b16 %v1438
    %v2861 = vunpack.c.l.b16 %v1439
    %v2862 = vunpack.c.l.b16 %v1440
    %v2863 = vunpack.c.l.b16 %v1441
    %v2864 = vunpack.c.l.b16 %v1442
    %v2865 = vunpack.c.h.b16 %v1439
    %v2866 = vunpack.c.h.b16 %v1440
    %v2867 = vunpack.c.h.b16 %v1441
    %v2868 = vunpack.c.h.b16 %v1442
    %v2869 = vpack.c.b16 %v2854, %v2853
    %v2870 = vpack.c.b16 %v2856, %v2855
    %v2871 = vpack.c.b16 %v2858, %v2857
    %v2872 = vpack.c.b16 %v2860, %v2859
    %v2873 = vpack.c.b16 %v2862, %v2861
    %v2874 = vpack.c.b16 %v2864, %v2863
    %v2875 = vpack.c.b16 %v2866, %v2865
    %v2876 = vpack.c.b16 %v2868, %v2867
    %2885 = vst [vmem:[#allocation2] sm:$0xff] %v2869
    %2886 = vst [vmem:[#allocation2 + $0x8] sm:$0xff] %v2870
    %2887 = vst [vmem:[#allocation2 + $0x10] sm:$0xff] %v2871
    %2888 = vst [vmem:[#allocation2 + $0x18] sm:$0xff] %v2872
    %2889 = vst [vmem:[#allocation2 + $0x20] sm:$0xff] %v2873
    %2890 = vst [vmem:[#allocation2 + $0x28] sm:$0xff] %v2874
    %2891 = vst [vmem:[#allocation2 + $0x30] sm:$0xff] %v2875
    %2892 = vst [vmem:[#allocation2 + $0x38] sm:$0xff] %v2876
    %v2901 = vunpack.c.l.b16 %v2837
    %v2902 = vunpack.c.l.b16 %v2838
    %v2903 = vunpack.c.l.b16 %v2839
    %v2904 = vunpack.c.l.b16 %v2840
    %v2905 = vunpack.c.h.b16 %v2837
    %v2906 = vunpack.c.h.b16 %v2838
    %v2907 = vunpack.c.h.b16 %v2839
    %v2908 = vunpack.c.h.b16 %v2840
    %v2909 = vunpack.c.l.b16 %v2841
    %v2910 = vunpack.c.l.b16 %v2842
    %v2911 = vunpack.c.l.b16 %v2843
    %v2912 = vunpack.c.l.b16 %v2844
    %v2913 = vunpack.c.h.b16 %v2841
    %v2914 = vunpack.c.h.b16 %v2842
    %v2915 = vunpack.c.h.b16 %v2843
    %v2916 = vunpack.c.h.b16 %v2844
    %v2917 = vpack.c.b16 %v2902, %v2901
    %v2918 = vpack.c.b16 %v2904, %v2903
    %v2919 = vpack.c.b16 %v2906, %v2905
    %v2920 = vpack.c.b16 %v2908, %v2907
    %v2921 = vpack.c.b16 %v2910, %v2909
    %v2922 = vpack.c.b16 %v2912, %v2911
    %v2923 = vpack.c.b16 %v2914, %v2913
    %v2924 = vpack.c.b16 %v2916, %v2915
    %2933 = vst [vmem:[#allocation4] sm:$0xff] %v2917
    %2934 = vst [vmem:[#allocation4 + $0x8] sm:$0xff] %v2918
    %2935 = vst [vmem:[#allocation4 + $0x10] sm:$0xff] %v2919
    %2936 = vst [vmem:[#allocation4 + $0x18] sm:$0xff] %v2920
    %2937 = vst [vmem:[#allocation4 + $0x20] sm:$0xff] %v2921
    %2938 = vst [vmem:[#allocation4 + $0x28] sm:$0xff] %v2922
    %2939 = vst [vmem:[#allocation4 + $0x30] sm:$0xff] %v2923
    %2940 = vst [vmem:[#allocation4 + $0x38] sm:$0xff] %v2924
    %2941 = vst [vmem:[#allocation6] sm:$0xff] %v2869
    %2942 = vst [vmem:[#allocation6 + $0x8] sm:$0xff] %v2870
    %2943 = vst [vmem:[#allocation6 + $0x10] sm:$0xff] %v2871
    %2944 = vst [vmem:[#allocation6 + $0x18] sm:$0xff] %v2872
    %2945 = vst [vmem:[#allocation6 + $0x40] sm:$0xff] %v2873
    %2946 = vst [vmem:[#allocation6 + $0x48] sm:$0xff] %v2874
    %2947 = vst [vmem:[#allocation6 + $0x50] sm:$0xff] %v2875
    %2948 = vst [vmem:[#allocation6 + $0x58] sm:$0xff] %v2876
    %s2949 = scalar_lea.vmem [#allocation6], 32
    %2950 = vst [vmem:[%s2949] sm:$0xff] %v2917
    %2951 = vst [vmem:[%s2949 + $0x8] sm:$0xff] %v2918
    %2952 = vst [vmem:[%s2949 + $0x10] sm:$0xff] %v2919
    %2953 = vst [vmem:[%s2949 + $0x18] sm:$0xff] %v2920
    %2954 = vst [vmem:[%s2949 + $0x40] sm:$0xff] %v2921
    %2955 = vst [vmem:[%s2949 + $0x48] sm:$0xff] %v2922
    %2956 = vst [vmem:[%s2949 + $0x50] sm:$0xff] %v2923
    %2957 = vst [vmem:[%s2949 + $0x58] sm:$0xff] %v2924
    // Predicated region
    $region42: #{project_network_forward.1} parent=1 // pred_check
      _
    $region43: #{project_network_forward.1} parent=1 // pred_check_branch
      %2959 = sbr.rel (0) target = $region45
    $region44: #{project_network_forward.1} parent=1 // pred_region
      %s2961 = ssub.s32 1024, 1024
      %2962 = vsyncadd [#allocation3], %s2961
      %s2963 = sshll.u32 [#allocation2], 4
      %s2964 = int_to_ptr.vmem [resolvable:$true] %s2963
      %2969 = dma.vmem_to_hbm [thread:$0]  %s2964, 1024, %s10, [#allocation3], 256, 256, 16
    $region45: #{project_network_forward.1} parent=1 // pred_fallthru
      _
    // Predicated region
    $region46: #{project_network_forward.1} parent=1 // pred_check
      _
    $region47: #{project_network_forward.1} parent=1 // pred_check_branch
      %2971 = sbr.rel (0) target = $region49
    $region48: #{project_network_forward.1} parent=1 // pred_region
      %s2973 = ssub.s32 1024, 1024
      %2974 = vsyncadd [#allocation5], %s2973
      %s2975 = sshll.u32 [#allocation4], 4
      %s2976 = int_to_ptr.vmem [resolvable:$true] %s2975
      %2981 = dma.vmem_to_hbm [thread:$0]  %s2976, 1024, %s11, [#allocation5], 256, 256, 16
    $region49: #{project_network_forward.1} parent=1 // pred_fallthru
      _
    // Predicated region
    $region50: #{project_network_forward.1} parent=1 // pred_check
      _
    $region51: #{project_network_forward.1} parent=1 // pred_check_branch
      %2983 = sbr.rel (0) target = $region53
    $region52: #{project_network_forward.1} parent=1 // pred_region
      %s2985 = ssub.s32 2048, 2048
      %2986 = vsyncadd [#allocation5], %s2985
      %s2987 = sshll.u32 [#allocation6], 4
      %s2988 = int_to_ptr.vmem [resolvable:$true] %s2987
      %2993 = dma.vmem_to_hbm [thread:$0]  %s2988, 2048, %s12, [#allocation5], 256, 256, 16
    $region53: #{project_network_forward.1} parent=1 // pred_fallthru
      _
    // Predicated region
    $region54: #{project_network_forward.1} parent=1 // pred_check
      _
    $region55: #{project_network_forward.1} parent=1 // pred_check_branch
      %2995 = sbr.rel (0) target = $region57
    $region56: #{project_network_forward.1} parent=1 // pred_region
      %2996 = dma.done [#allocation3], 1024
    $region57: #{project_network_forward.1} parent=1 // pred_fallthru
      _
    // Predicated region
    $region58: #{project_network_forward.1} parent=1 // pred_check
      _
    $region59: #{project_network_forward.1} parent=1 // pred_check_branch
      %2998 = sbr.rel (0) target = $region61
    $region60: #{project_network_forward.1} parent=1 // pred_region
      %2999 = dma.done [#allocation5], 1024
    $region61: #{project_network_forward.1} parent=1 // pred_fallthru
      _
    // Predicated region
    $region62: #{project_network_forward.1} parent=1 // pred_check
      _
    $region63: #{project_network_forward.1} parent=1 // pred_check_branch
      %3001 = sbr.rel (0) target = $region65
    $region64: #{project_network_forward.1} parent=1 // pred_region
      %3002 = dma.done [#allocation5], 2048
    $region65: #{project_network_forward.1} parent=1 // pred_fallthru
      _
    %3003 = vsyncpa [#allocation3], 1
    %3004 = vsyncpa [#allocation5], 1

</llo_original>
